<compile_context>
chip_gen: v6e
topology: v6e:2x2x1
jax: 0.10.0
libtpu: 0.0.40
codegen_flags: <defaults>
</compile_context>

<pallas_src>
import functools
import math

import jax
import jax.numpy as jnp
from jax.experimental import pallas as pl
from jax.experimental.pallas import tpu as pltpu


# ---------------------------------------------------------------------------
# Fused Pallas kernel: full VAE forward
# ---------------------------------------------------------------------------
def _vae_fused_kernel(x_ref, w0_ref, b0_ref, w1_ref, b1_ref,
                      wmu_ref, bmu_ref, wlv_ref, blv_ref,
                      wd0_ref, bd0_ref, wd1_ref, bd1_ref,
                      wd2_ref, bd2_ref, eps_ref,
                      recon_ref, mu_ref, logvar_ref,
                      d1_ref,
                      *, n_instance, batch):
    f32 = jnp.float32
    h1 = wd0_ref.shape[1]         # first post-flatten hidden size

    # ---------------- encoder ----------------
    # enc0: Linear(n_dim -> hidden) + ReLU over ALL instances at once.
    # x is stacked instance-major (row = i*batch + b), so this is one big
    # MXU matmul instead of n_instance tiny ones.
    h_all = jnp.maximum(
        jnp.dot(x_ref[...], w0_ref[...], preferred_element_type=f32) + b0_ref[...],
        0.0)                                                     # (I*Bp, hidden)

    # Flatten + enc1 (Linear(n_instance*hidden -> h1)) folded into a sum of
    # per-instance (hidden, h1) matmuls -> no in-kernel reshape / relayout.
    acc = jnp.zeros((batch, h1), f32)
    for i in range(n_instance):                                  # static unroll
        hi = h_all[i * batch:(i + 1) * batch, :]                 # 8-aligned static slice
        acc = acc + jnp.dot(hi, w1_ref[i], preferred_element_type=f32)
    h = jnp.maximum(acc + b1_ref[...], 0.0)                      # (Bp, h1), enc1 + ReLU

    # ---------------- mu / logvar (share one read of h) ----------------
    mu = jnp.dot(h, wmu_ref[...], preferred_element_type=f32) + bmu_ref[...]
    logvar = jnp.dot(h, wlv_ref[...], preferred_element_type=f32) + blv_ref[...]
    mu_ref[...] = mu
    logvar_ref[...] = logvar

    # ---------------- reparameterize (fused epilogue: EUP exp + VPU FMA) ----
    z = mu + eps_ref[...] * jnp.exp(0.5 * logvar)                # (Bp, h2)

    # ---------------- decoder ----------------
    d0 = jnp.maximum(
        jnp.dot(z, wd0_ref[...], preferred_element_type=f32) + bd0_ref[...], 0.0)  # (Bp, h1)
    for i in range(n_instance):
        # dec1 chunk for instance i (Unflatten folded in): Linear(h1 -> hidden) + ReLU
        d1i = jnp.maximum(
            jnp.dot(d0, wd1_ref[i], preferred_element_type=f32) + bd1_ref[i], 0.0)  # (Bp, hidden)
        d1_ref[pl.ds(i * batch, batch), :] = d1i                 # aligned slice store
    # dec2: Linear(hidden -> n_dim), no activation, over ALL instances at once.
    recon_ref[...] = (
        jnp.dot(d1_ref[...], wd2_ref[...], preferred_element_type=f32) + bd2_ref[...])


def _full_spec(shape):
    return pl.BlockSpec(shape, lambda i, _n=len(shape): (0,) * _n)


def vae_forward(params, dims, x, rng_key):
    """Fused forward pass: returns (recon_x, mu, logvar) like VAE.forward."""
    B, n_instance, n_dim = x.shape
    hidden = dims["hidden_at_flatten"]
    flat, h1, h2 = dims["flat"], dims["h1"], dims["h2"]

    # Pad batch to a sublane multiple so every in-kernel slice is (8,128)-aligned.
    Bp = ((B + 7) // 8) * 8

    # Layout plumbing OUTSIDE the kernel (cheap XLA reshapes/transposes in HBM):
    xf = x.astype(jnp.float32)
    if Bp != B:
        xf = jnp.pad(xf, ((0, Bp - B), (0, 0), (0, 0)))
    xt2 = jnp.transpose(xf, (1, 0, 2)).reshape(n_instance * Bp, n_dim)   # instance-major rows

    w1_3 = params["enc1_w"].reshape(n_instance, hidden, h1)              # per-instance enc1 chunks
    wd1_3 = jnp.transpose(
        params["dec1_w"].reshape(h1, n_instance, hidden), (1, 0, 2))     # (I, h1, hidden)
    bd1_3 = params["dec1_b"].reshape(n_instance, 1, hidden)

    eps = jax.random.normal(rng_key, (B, h2), jnp.float32)               # torch.randn_like(std)
    eps_p = jnp.pad(eps, ((0, Bp - B), (0, 0))) if Bp != B else eps

    args = [
        xt2,
        params["enc0_w"], params["enc0_b"].reshape(1, hidden),
        w1_3, params["enc1_b"].reshape(1, h1),
        params["fc1_w"], params["fc1_b"].reshape(1, h2),
        params["fc2_w"], params["fc2_b"].reshape(1, h2),
        params["dec0_w"], params["dec0_b"].reshape(1, h1),
        wd1_3, bd1_3,
        params["dec2_w"], params["dec2_b"].reshape(1, n_dim),
        eps_p,
    ]

    flops = 2 * Bp * (n_instance * n_dim * hidden   # enc0
                      + flat * h1                   # enc1
                      + 2 * h1 * h2                 # fc1 + fc2
                      + h2 * h1                     # dec0
                      + h1 * flat                   # dec1
                      + n_instance * hidden * n_dim)  # dec2
    bytes_accessed = 4 * (sum(int(a.size) for a in args)
                          + n_instance * Bp * n_dim + 2 * Bp * h2)

    recon2, mu_p, logvar_p = pl.pallas_call(
        functools.partial(_vae_fused_kernel, n_instance=n_instance, batch=Bp),
        out_shape=(jax.ShapeDtypeStruct((n_instance * Bp, n_dim), jnp.float32),
                   jax.ShapeDtypeStruct((Bp, h2), jnp.float32),
                   jax.ShapeDtypeStruct((Bp, h2), jnp.float32)),
        grid=(1,),
        in_specs=[_full_spec(a.shape) for a in args],
        out_specs=(_full_spec((n_instance * Bp, n_dim)),
                   _full_spec((Bp, h2)),
                   _full_spec((Bp, h2))),
        scratch_shapes=[pltpu.VMEM((n_instance * Bp, hidden), jnp.float32)],
        compiler_params=pltpu.CompilerParams(
            dimension_semantics=("arbitrary",),
            vmem_limit_bytes=32 * 1024 * 1024),
        cost_estimate=pl.CostEstimate(
            flops=int(flops),
            transcendentals=int(Bp * h2),
            bytes_accessed=int(bytes_accessed)),
    )(*args)

    recon = jnp.transpose(recon2.reshape(n_instance, Bp, n_dim), (1, 0, 2))[:B]  # (B, I, n_dim)
    return recon, mu_p[:B], logvar_p[:B]


# ---------------------------------------------------------------------------
# VAE architecture bookkeeping (defaults: n_layer_before_flatten=1, after=1)
# ---------------------------------------------------------------------------
def vae_dims(n_instance, n_dim, hidden_dim):
    """Reproduce the dimension bookkeeping of VAE.__init__ (default layer counts)."""
    hidden_at_flatten = hidden_dim                       # after before-flatten layer
    hidden_current = n_instance * hidden_at_flatten      # flatten
    div = 1.0 + 3.0 * 1.0                                # get_coefs(1.0, 'decoder')
    coef = 1.0 * 0.75
    hidden_next = int(hidden_current / div)              # h1
    h1_in, h1 = hidden_current, hidden_next
    div = 1.0 + 3.0 * coef                               # 3.25
    hidden_current, hidden_next = h1, int(h1 / div)
    h2 = hidden_next                                     # embed_dim
    return dict(hidden_at_flatten=hidden_at_flatten, flat=h1_in, h1=h1, h2=h2)


def _torch_linear_init(key, fan_in, fan_out):
    """PyTorch nn.Linear default init: U(-1/sqrt(fan_in), 1/sqrt(fan_in))."""
    kw, kb = jax.random.split(key)
    bound = 1.0 / math.sqrt(fan_in)
    w = jax.random.uniform(kw, (fan_in, fan_out), jnp.float32, -bound, bound)
    b = jax.random.uniform(kb, (fan_out,), jnp.float32, -bound, bound)
    return w, b


def init_vae_params(key, n_instance, n_dim, hidden_dim):
    d = vae_dims(n_instance, n_dim, hidden_dim)
    keys = jax.random.split(key, 7)
    p = {}
    p["enc0_w"], p["enc0_b"] = _torch_linear_init(keys[0], n_dim, hidden_dim)    # Linear(n_dim, hidden)
    p["enc1_w"], p["enc1_b"] = _torch_linear_init(keys[1], d["flat"], d["h1"])   # Linear(flat, h1)
    p["fc1_w"], p["fc1_b"] = _torch_linear_init(keys[2], d["h1"], d["h2"])       # mu
    p["fc2_w"], p["fc2_b"] = _torch_linear_init(keys[3], d["h1"], d["h2"])       # logvar
    p["dec0_w"], p["dec0_b"] = _torch_linear_init(keys[4], d["h2"], d["h1"])     # Linear(h2, h1)
    p["dec1_w"], p["dec1_b"] = _torch_linear_init(keys[5], d["h1"], d["flat"])   # Linear(h1, flat)
    p["dec2_w"], p["dec2_b"] = _torch_linear_init(keys[6], hidden_dim, n_dim)    # Linear(hidden, n_dim)
    return p, d


# ---------------------------------------------------------------------------
# Pure-JAX reference (same math / same eps) for a correctness spot-check
# ---------------------------------------------------------------------------
def vae_reference(params, dims, x, rng_key):
    B, n_instance, n_dim = x.shape
    hidden = dims["hidden_at_flatten"]
    h = jax.nn.relu(x.reshape(B * n_instance, n_dim) @ params["enc0_w"] + params["enc0_b"])
    h = h.reshape(B, n_instance * hidden)
    h = jax.nn.relu(h @ params["enc1_w"] + params["enc1_b"])
    mu = h @ params["fc1_w"] + params["fc1_b"]
    logvar = h @ params["fc2_w"] + params["fc2_b"]
    eps = jax.random.normal(rng_key, mu.shape, jnp.float32)
    z = mu + eps * jnp.exp(0.5 * logvar)
    d = jax.nn.relu(z @ params["dec0_w"] + params["dec0_b"])
    d = jax.nn.relu(d @ params["dec1_w"] + params["dec1_b"])
    d = d.reshape(B * n_instance, hidden)
    recon = (d @ params["dec2_w"] + params["dec2_b"]).reshape(B, n_instance, n_dim)
    return recon, mu, logvar


# ---------------------------------------------------------------------------
if __name__ == "__main__":
    B = 2
    N_INSTANCE = 8
    N_DIM = 32
    HIDDEN_DIM = 32

    key = jax.random.PRNGKey(0)
    k_params, k_x, k_eps = jax.random.split(key, 3)

    params, dims = init_vae_params(k_params, N_INSTANCE, N_DIM, HIDDEN_DIM)
    x = jax.random.normal(k_x, (B, N_INSTANCE, N_DIM), jnp.float32)

    fwd = jax.jit(lambda p, xx, kk: vae_forward(p, dims, xx, kk))
    recon, mu, logvar = fwd(params, x, k_eps)
    jax.block_until_ready((recon, mu, logvar))

    assert recon.shape == (B, N_INSTANCE, N_DIM)
    assert mu.shape == (B, dims["h2"])
    assert logvar.shape == (B, dims["h2"])

    # Correctness spot-check against the pure-JAX reference (same eps).
    r_recon, r_mu, r_logvar = vae_reference(params, dims, x, k_eps)
    assert jnp.allclose(mu, r_mu, atol=1e-4, rtol=1e-4)
    assert jnp.allclose(logvar, r_logvar, atol=1e-4, rtol=1e-4)
    assert jnp.allclose(recon, r_recon, atol=1e-3, rtol=1e-3)

    print("KERNEL_OK")
</pallas_src>

<mosaic_0001>
module attributes {stable_mosaic.version = 11 : i64} {
  func.func @_vae_fused_kernel(%arg0: i32, %arg1: memref<64x32xf32, #tpu.memory_space<vmem>>, %arg2: memref<32x32xf32, #tpu.memory_space<vmem>>, %arg3: memref<1x32xf32, #tpu.memory_space<vmem>>, %arg4: memref<8x32x64xf32, #tpu.memory_space<vmem>>, %arg5: memref<1x64xf32, #tpu.memory_space<vmem>>, %arg6: memref<64x19xf32, #tpu.memory_space<vmem>>, %arg7: memref<1x19xf32, #tpu.memory_space<vmem>>, %arg8: memref<64x19xf32, #tpu.memory_space<vmem>>, %arg9: memref<1x19xf32, #tpu.memory_space<vmem>>, %arg10: memref<19x64xf32, #tpu.memory_space<vmem>>, %arg11: memref<1x64xf32, #tpu.memory_space<vmem>>, %arg12: memref<8x64x32xf32, #tpu.memory_space<vmem>>, %arg13: memref<8x1x32xf32, #tpu.memory_space<vmem>>, %arg14: memref<32x32xf32, #tpu.memory_space<vmem>>, %arg15: memref<1x32xf32, #tpu.memory_space<vmem>>, %arg16: memref<8x19xf32, #tpu.memory_space<vmem>>, %arg17: memref<64x32xf32, #tpu.memory_space<vmem>>, %arg18: memref<8x19xf32, #tpu.memory_space<vmem>>, %arg19: memref<8x19xf32, #tpu.memory_space<vmem>>, %arg20: memref<64x32xf32, #tpu.memory_space<vmem>>) attributes {dimension_semantics = [#tpu.dimension_semantics<arbitrary>], iteration_bounds = array<i64: 1>, scalar_prefetch = 0 : i64, scratch_operands = 1 : i64, tpu.core_type = #tpu.core_type<tc>, window_params = [{pipeline_mode = #tpu.pipeline_mode<synchronous>, transform_indices = @transform_0, window_bounds = array<i64: 64, 32>}, {pipeline_mode = #tpu.pipeline_mode<synchronous>, transform_indices = @transform_1, window_bounds = array<i64: 32, 32>}, {pipeline_mode = #tpu.pipeline_mode<synchronous>, transform_indices = @transform_2, window_bounds = array<i64: 1, 32>}, {pipeline_mode = #tpu.pipeline_mode<synchronous>, transform_indices = @transform_3, window_bounds = array<i64: 8, 32, 64>}, {pipeline_mode = #tpu.pipeline_mode<synchronous>, transform_indices = @transform_4, window_bounds = array<i64: 1, 64>}, {pipeline_mode = #tpu.pipeline_mode<synchronous>, transform_indices = @transform_5, window_bounds = array<i64: 64, 19>}, {pipeline_mode = #tpu.pipeline_mode<synchronous>, transform_indices = @transform_6, window_bounds = array<i64: 1, 19>}, {pipeline_mode = #tpu.pipeline_mode<synchronous>, transform_indices = @transform_7, window_bounds = array<i64: 64, 19>}, {pipeline_mode = #tpu.pipeline_mode<synchronous>, transform_indices = @transform_8, window_bounds = array<i64: 1, 19>}, {pipeline_mode = #tpu.pipeline_mode<synchronous>, transform_indices = @transform_9, window_bounds = array<i64: 19, 64>}, {pipeline_mode = #tpu.pipeline_mode<synchronous>, transform_indices = @transform_10, window_bounds = array<i64: 1, 64>}, {pipeline_mode = #tpu.pipeline_mode<synchronous>, transform_indices = @transform_11, window_bounds = array<i64: 8, 64, 32>}, {pipeline_mode = #tpu.pipeline_mode<synchronous>, transform_indices = @transform_12, window_bounds = array<i64: 8, 1, 32>}, {pipeline_mode = #tpu.pipeline_mode<synchronous>, transform_indices = @transform_13, window_bounds = array<i64: 32, 32>}, {pipeline_mode = #tpu.pipeline_mode<synchronous>, transform_indices = @transform_14, window_bounds = array<i64: 1, 32>}, {pipeline_mode = #tpu.pipeline_mode<synchronous>, transform_indices = @transform_15, window_bounds = array<i64: 8, 19>}, {pipeline_mode = #tpu.pipeline_mode<synchronous>, transform_indices = @transform_16, window_bounds = array<i64: 64, 32>}, {pipeline_mode = #tpu.pipeline_mode<synchronous>, transform_indices = @transform_17, window_bounds = array<i64: 8, 19>}, {pipeline_mode = #tpu.pipeline_mode<synchronous>, transform_indices = @transform_18, window_bounds = array<i64: 8, 19>}]} {
    %c0 = arith.constant 0 : index
    %c0_0 = arith.constant 0 : index
    %0 = vector.load %arg1[%c0, %c0_0] : memref<64x32xf32, #tpu.memory_space<vmem>>, vector<64x32xf32>
    %c0_1 = arith.constant 0 : index
    %c0_2 = arith.constant 0 : index
    %1 = vector.load %arg2[%c0_1, %c0_2] : memref<32x32xf32, #tpu.memory_space<vmem>>, vector<32x32xf32>
    %cst = arith.constant dense<0.000000e+00> : vector<64x32xf32>
    %2 = tpu.matmul %0, %1, %cst {dimension_numbers = #tpu.dot_dimension_numbers<[1], [0], [0], [1], [0, 0, 1, 1], [], []>} : vector<64x32xf32>, vector<32x32xf32>, vector<64x32xf32> -> vector<64x32xf32>
    %c0_3 = arith.constant 0 : index
    %c0_4 = arith.constant 0 : index
    %3 = vector.load %arg3[%c0_3, %c0_4] : memref<1x32xf32, #tpu.memory_space<vmem>>, vector<1x32xf32>
    %4 = vector.broadcast %3 : vector<1x32xf32> to vector<64x32xf32>
    %5 = arith.addf %2, %4 : vector<64x32xf32>
    %cst_5 = arith.constant 0.000000e+00 : f32
    %6 = vector.broadcast %cst_5 : f32 to vector<64x32xf32>
    %7 = arith.maximumf %5, %6 : vector<64x32xf32>
    %cst_6 = arith.constant 0.000000e+00 : f32
    %8 = vector.broadcast %cst_6 : f32 to vector<8x64xf32>
    %9 = vector.extract_strided_slice %7 {offsets = [0, 0], sizes = [8, 32], strides = [1, 1]} : vector<64x32xf32> to vector<8x32xf32>
    %c0_7 = arith.constant 0 : index
    %c0_8 = arith.constant 0 : index
    %c0_9 = arith.constant 0 : index
    %10 = vector.load %arg4[%c0_7, %c0_8, %c0_9] : memref<8x32x64xf32, #tpu.memory_space<vmem>>, vector<1x32x64xf32>
    %11 = vector.shape_cast %10 : vector<1x32x64xf32> to vector<32x64xf32>
    %cst_10 = arith.constant dense<0.000000e+00> : vector<8x64xf32>
    %12 = tpu.matmul %9, %11, %cst_10 {dimension_numbers = #tpu.dot_dimension_numbers<[1], [0], [0], [1], [0, 0, 1, 1], [], []>} : vector<8x32xf32>, vector<32x64xf32>, vector<8x64xf32> -> vector<8x64xf32>
    %13 = arith.addf %8, %12 : vector<8x64xf32>
    %14 = vector.extract_strided_slice %7 {offsets = [8, 0], sizes = [8, 32], strides = [1, 1]} : vector<64x32xf32> to vector<8x32xf32>
    %c1 = arith.constant 1 : index
    %c0_11 = arith.constant 0 : index
    %c0_12 = arith.constant 0 : index
    %15 = vector.load %arg4[%c1, %c0_11, %c0_12] : memref<8x32x64xf32, #tpu.memory_space<vmem>>, vector<1x32x64xf32>
    %16 = vector.shape_cast %15 : vector<1x32x64xf32> to vector<32x64xf32>
    %cst_13 = arith.constant dense<0.000000e+00> : vector<8x64xf32>
    %17 = tpu.matmul %14, %16, %cst_13 {dimension_numbers = #tpu.dot_dimension_numbers<[1], [0], [0], [1], [0, 0, 1, 1], [], []>} : vector<8x32xf32>, vector<32x64xf32>, vector<8x64xf32> -> vector<8x64xf32>
    %18 = arith.addf %13, %17 : vector<8x64xf32>
    %19 = vector.extract_strided_slice %7 {offsets = [16, 0], sizes = [8, 32], strides = [1, 1]} : vector<64x32xf32> to vector<8x32xf32>
    %c2 = arith.constant 2 : index
    %c0_14 = arith.constant 0 : index
    %c0_15 = arith.constant 0 : index
    %20 = vector.load %arg4[%c2, %c0_14, %c0_15] : memref<8x32x64xf32, #tpu.memory_space<vmem>>, vector<1x32x64xf32>
    %21 = vector.shape_cast %20 : vector<1x32x64xf32> to vector<32x64xf32>
    %cst_16 = arith.constant dense<0.000000e+00> : vector<8x64xf32>
    %22 = tpu.matmul %19, %21, %cst_16 {dimension_numbers = #tpu.dot_dimension_numbers<[1], [0], [0], [1], [0, 0, 1, 1], [], []>} : vector<8x32xf32>, vector<32x64xf32>, vector<8x64xf32> -> vector<8x64xf32>
    %23 = arith.addf %18, %22 : vector<8x64xf32>
    %24 = vector.extract_strided_slice %7 {offsets = [24, 0], sizes = [8, 32], strides = [1, 1]} : vector<64x32xf32> to vector<8x32xf32>
    %c3 = arith.constant 3 : index
    %c0_17 = arith.constant 0 : index
    %c0_18 = arith.constant 0 : index
    %25 = vector.load %arg4[%c3, %c0_17, %c0_18] : memref<8x32x64xf32, #tpu.memory_space<vmem>>, vector<1x32x64xf32>
    %26 = vector.shape_cast %25 : vector<1x32x64xf32> to vector<32x64xf32>
    %cst_19 = arith.constant dense<0.000000e+00> : vector<8x64xf32>
    %27 = tpu.matmul %24, %26, %cst_19 {dimension_numbers = #tpu.dot_dimension_numbers<[1], [0], [0], [1], [0, 0, 1, 1], [], []>} : vector<8x32xf32>, vector<32x64xf32>, vector<8x64xf32> -> vector<8x64xf32>
    %28 = arith.addf %23, %27 : vector<8x64xf32>
    %29 = vector.extract_strided_slice %7 {offsets = [32, 0], sizes = [8, 32], strides = [1, 1]} : vector<64x32xf32> to vector<8x32xf32>
    %c4 = arith.constant 4 : index
    %c0_20 = arith.constant 0 : index
    %c0_21 = arith.constant 0 : index
    %30 = vector.load %arg4[%c4, %c0_20, %c0_21] : memref<8x32x64xf32, #tpu.memory_space<vmem>>, vector<1x32x64xf32>
    %31 = vector.shape_cast %30 : vector<1x32x64xf32> to vector<32x64xf32>
    %cst_22 = arith.constant dense<0.000000e+00> : vector<8x64xf32>
    %32 = tpu.matmul %29, %31, %cst_22 {dimension_numbers = #tpu.dot_dimension_numbers<[1], [0], [0], [1], [0, 0, 1, 1], [], []>} : vector<8x32xf32>, vector<32x64xf32>, vector<8x64xf32> -> vector<8x64xf32>
    %33 = arith.addf %28, %32 : vector<8x64xf32>
    %34 = vector.extract_strided_slice %7 {offsets = [40, 0], sizes = [8, 32], strides = [1, 1]} : vector<64x32xf32> to vector<8x32xf32>
    %c5 = arith.constant 5 : index
    %c0_23 = arith.constant 0 : index
    %c0_24 = arith.constant 0 : index
    %35 = vector.load %arg4[%c5, %c0_23, %c0_24] : memref<8x32x64xf32, #tpu.memory_space<vmem>>, vector<1x32x64xf32>
    %36 = vector.shape_cast %35 : vector<1x32x64xf32> to vector<32x64xf32>
    %cst_25 = arith.constant dense<0.000000e+00> : vector<8x64xf32>
    %37 = tpu.matmul %34, %36, %cst_25 {dimension_numbers = #tpu.dot_dimension_numbers<[1], [0], [0], [1], [0, 0, 1, 1], [], []>} : vector<8x32xf32>, vector<32x64xf32>, vector<8x64xf32> -> vector<8x64xf32>
    %38 = arith.addf %33, %37 : vector<8x64xf32>
    %39 = vector.extract_strided_slice %7 {offsets = [48, 0], sizes = [8, 32], strides = [1, 1]} : vector<64x32xf32> to vector<8x32xf32>
    %c6 = arith.constant 6 : index
    %c0_26 = arith.constant 0 : index
    %c0_27 = arith.constant 0 : index
    %40 = vector.load %arg4[%c6, %c0_26, %c0_27] : memref<8x32x64xf32, #tpu.memory_space<vmem>>, vector<1x32x64xf32>
    %41 = vector.shape_cast %40 : vector<1x32x64xf32> to vector<32x64xf32>
    %cst_28 = arith.constant dense<0.000000e+00> : vector<8x64xf32>
    %42 = tpu.matmul %39, %41, %cst_28 {dimension_numbers = #tpu.dot_dimension_numbers<[1], [0], [0], [1], [0, 0, 1, 1], [], []>} : vector<8x32xf32>, vector<32x64xf32>, vector<8x64xf32> -> vector<8x64xf32>
    %43 = arith.addf %38, %42 : vector<8x64xf32>
    %44 = vector.extract_strided_slice %7 {offsets = [56, 0], sizes = [8, 32], strides = [1, 1]} : vector<64x32xf32> to vector<8x32xf32>
    %c7 = arith.constant 7 : index
    %c0_29 = arith.constant 0 : index
    %c0_30 = arith.constant 0 : index
    %45 = vector.load %arg4[%c7, %c0_29, %c0_30] : memref<8x32x64xf32, #tpu.memory_space<vmem>>, vector<1x32x64xf32>
    %46 = vector.shape_cast %45 : vector<1x32x64xf32> to vector<32x64xf32>
    %cst_31 = arith.constant dense<0.000000e+00> : vector<8x64xf32>
    %47 = tpu.matmul %44, %46, %cst_31 {dimension_numbers = #tpu.dot_dimension_numbers<[1], [0], [0], [1], [0, 0, 1, 1], [], []>} : vector<8x32xf32>, vector<32x64xf32>, vector<8x64xf32> -> vector<8x64xf32>
    %48 = arith.addf %43, %47 : vector<8x64xf32>
    %c0_32 = arith.constant 0 : index
    %c0_33 = arith.constant 0 : index
    %49 = vector.load %arg5[%c0_32, %c0_33] : memref<1x64xf32, #tpu.memory_space<vmem>>, vector<1x64xf32>
    %50 = vector.broadcast %49 : vector<1x64xf32> to vector<8x64xf32>
    %51 = arith.addf %48, %50 : vector<8x64xf32>
    %cst_34 = arith.constant 0.000000e+00 : f32
    %52 = vector.broadcast %cst_34 : f32 to vector<8x64xf32>
    %53 = arith.maximumf %51, %52 : vector<8x64xf32>
    %c0_35 = arith.constant 0 : index
    %c0_36 = arith.constant 0 : index
    %54 = vector.load %arg6[%c0_35, %c0_36] : memref<64x19xf32, #tpu.memory_space<vmem>>, vector<64x19xf32>
    %cst_37 = arith.constant dense<0.000000e+00> : vector<8x19xf32>
    %55 = tpu.matmul %53, %54, %cst_37 {dimension_numbers = #tpu.dot_dimension_numbers<[1], [0], [0], [1], [0, 0, 1, 1], [], []>} : vector<8x64xf32>, vector<64x19xf32>, vector<8x19xf32> -> vector<8x19xf32>
    %c0_38 = arith.constant 0 : index
    %c0_39 = arith.constant 0 : index
    %56 = vector.load %arg7[%c0_38, %c0_39] : memref<1x19xf32, #tpu.memory_space<vmem>>, vector<1x19xf32>
    %57 = vector.broadcast %56 : vector<1x19xf32> to vector<8x19xf32>
    %58 = arith.addf %55, %57 : vector<8x19xf32>
    %c0_40 = arith.constant 0 : index
    %c0_41 = arith.constant 0 : index
    %59 = vector.load %arg8[%c0_40, %c0_41] : memref<64x19xf32, #tpu.memory_space<vmem>>, vector<64x19xf32>
    %cst_42 = arith.constant dense<0.000000e+00> : vector<8x19xf32>
    %60 = tpu.matmul %53, %59, %cst_42 {dimension_numbers = #tpu.dot_dimension_numbers<[1], [0], [0], [1], [0, 0, 1, 1], [], []>} : vector<8x64xf32>, vector<64x19xf32>, vector<8x19xf32> -> vector<8x19xf32>
    %c0_43 = arith.constant 0 : index
    %c0_44 = arith.constant 0 : index
    %61 = vector.load %arg9[%c0_43, %c0_44] : memref<1x19xf32, #tpu.memory_space<vmem>>, vector<1x19xf32>
    %62 = vector.broadcast %61 : vector<1x19xf32> to vector<8x19xf32>
    %63 = arith.addf %60, %62 : vector<8x19xf32>
    %c0_45 = arith.constant 0 : index
    %c0_46 = arith.constant 0 : index
    %64 = vector.load %arg18[%c0_45, %c0_46] : memref<8x19xf32, #tpu.memory_space<vmem>>, vector<8x19xf32>
    tpu.vector_store %arg18[%c0_45, %c0_46], %58 {strides = array<i32>} : memref<8x19xf32, #tpu.memory_space<vmem>>, vector<8x19xf32>,
    %c0_47 = arith.constant 0 : index
    %c0_48 = arith.constant 0 : index
    %65 = vector.load %arg19[%c0_47, %c0_48] : memref<8x19xf32, #tpu.memory_space<vmem>>, vector<8x19xf32>
    tpu.vector_store %arg19[%c0_47, %c0_48], %63 {strides = array<i32>} : memref<8x19xf32, #tpu.memory_space<vmem>>, vector<8x19xf32>,
    %c0_49 = arith.constant 0 : index
    %c0_50 = arith.constant 0 : index
    %66 = vector.load %arg16[%c0_49, %c0_50] : memref<8x19xf32, #tpu.memory_space<vmem>>, vector<8x19xf32>
    %cst_51 = arith.constant 5.000000e-01 : f32
    %67 = vector.broadcast %cst_51 : f32 to vector<8x19xf32>
    %68 = arith.mulf %67, %63 : vector<8x19xf32>
    %69 = math.exp %68 : vector<8x19xf32>
    %70 = arith.mulf %66, %69 : vector<8x19xf32>
    %71 = arith.addf %58, %70 : vector<8x19xf32>
    %c0_52 = arith.constant 0 : index
    %c0_53 = arith.constant 0 : index
    %72 = vector.load %arg10[%c0_52, %c0_53] : memref<19x64xf32, #tpu.memory_space<vmem>>, vector<19x64xf32>
    %cst_54 = arith.constant dense<0.000000e+00> : vector<8x64xf32>
    %73 = tpu.matmul %71, %72, %cst_54 {dimension_numbers = #tpu.dot_dimension_numbers<[1], [0], [0], [1], [0, 0, 1, 1], [], []>} : vector<8x19xf32>, vector<19x64xf32>, vector<8x64xf32> -> vector<8x64xf32>
    %c0_55 = arith.constant 0 : index
    %c0_56 = arith.constant 0 : index
    %74 = vector.load %arg11[%c0_55, %c0_56] : memref<1x64xf32, #tpu.memory_space<vmem>>, vector<1x64xf32>
    %75 = vector.broadcast %74 : vector<1x64xf32> to vector<8x64xf32>
    %76 = arith.addf %73, %75 : vector<8x64xf32>
    %cst_57 = arith.constant 0.000000e+00 : f32
    %77 = vector.broadcast %cst_57 : f32 to vector<8x64xf32>
    %78 = arith.maximumf %76, %77 : vector<8x64xf32>
    %c0_58 = arith.constant 0 : index
    %c0_59 = arith.constant 0 : index
    %c0_60 = arith.constant 0 : index
    %79 = vector.load %arg12[%c0_58, %c0_59, %c0_60] : memref<8x64x32xf32, #tpu.memory_space<vmem>>, vector<1x64x32xf32>
    %80 = vector.shape_cast %79 : vector<1x64x32xf32> to vector<64x32xf32>
    %cst_61 = arith.constant dense<0.000000e+00> : vector<8x32xf32>
    %81 = tpu.matmul %78, %80, %cst_61 {dimension_numbers = #tpu.dot_dimension_numbers<[1], [0], [0], [1], [0, 0, 1, 1], [], []>} : vector<8x64xf32>, vector<64x32xf32>, vector<8x32xf32> -> vector<8x32xf32>
    %c0_62 = arith.constant 0 : index
    %c0_63 = arith.constant 0 : index
    %c0_64 = arith.constant 0 : index
    %82 = vector.load %arg13[%c0_62, %c0_63, %c0_64] : memref<8x1x32xf32, #tpu.memory_space<vmem>>, vector<1x1x32xf32>
    %83 = vector.shape_cast %82 : vector<1x1x32xf32> to vector<1x32xf32>
    %84 = vector.broadcast %83 : vector<1x32xf32> to vector<8x32xf32>
    %85 = arith.addf %81, %84 : vector<8x32xf32>
    %cst_65 = arith.constant 0.000000e+00 : f32
    %86 = vector.broadcast %cst_65 : f32 to vector<8x32xf32>
    %87 = arith.maximumf %85, %86 : vector<8x32xf32>
    %c0_66 = arith.constant 0 : index
    %c0_67 = arith.constant 0 : index
    %88 = vector.load %arg20[%c0_66, %c0_67] : memref<64x32xf32, #tpu.memory_space<vmem>>, vector<8x32xf32>
    tpu.vector_store %arg20[%c0_66, %c0_67], %87 {strides = array<i32>} : memref<64x32xf32, #tpu.memory_space<vmem>>, vector<8x32xf32>,
    %c1_68 = arith.constant 1 : index
    %c0_69 = arith.constant 0 : index
    %c0_70 = arith.constant 0 : index
    %89 = vector.load %arg12[%c1_68, %c0_69, %c0_70] : memref<8x64x32xf32, #tpu.memory_space<vmem>>, vector<1x64x32xf32>
    %90 = vector.shape_cast %89 : vector<1x64x32xf32> to vector<64x32xf32>
    %cst_71 = arith.constant dense<0.000000e+00> : vector<8x32xf32>
    %91 = tpu.matmul %78, %90, %cst_71 {dimension_numbers = #tpu.dot_dimension_numbers<[1], [0], [0], [1], [0, 0, 1, 1], [], []>} : vector<8x64xf32>, vector<64x32xf32>, vector<8x32xf32> -> vector<8x32xf32>
    %c1_72 = arith.constant 1 : index
    %c0_73 = arith.constant 0 : index
    %c0_74 = arith.constant 0 : index
    %92 = vector.load %arg13[%c1_72, %c0_73, %c0_74] : memref<8x1x32xf32, #tpu.memory_space<vmem>>, vector<1x1x32xf32>
    %93 = vector.shape_cast %92 : vector<1x1x32xf32> to vector<1x32xf32>
    %94 = vector.broadcast %93 : vector<1x32xf32> to vector<8x32xf32>
    %95 = arith.addf %91, %94 : vector<8x32xf32>
    %cst_75 = arith.constant 0.000000e+00 : f32
    %96 = vector.broadcast %cst_75 : f32 to vector<8x32xf32>
    %97 = arith.maximumf %95, %96 : vector<8x32xf32>
    %c8 = arith.constant 8 : index
    %c0_76 = arith.constant 0 : index
    %98 = vector.load %arg20[%c8, %c0_76] : memref<64x32xf32, #tpu.memory_space<vmem>>, vector<8x32xf32>
    tpu.vector_store %arg20[%c8, %c0_76], %97 {strides = array<i32>} : memref<64x32xf32, #tpu.memory_space<vmem>>, vector<8x32xf32>,
    %c2_77 = arith.constant 2 : index
    %c0_78 = arith.constant 0 : index
    %c0_79 = arith.constant 0 : index
    %99 = vector.load %arg12[%c2_77, %c0_78, %c0_79] : memref<8x64x32xf32, #tpu.memory_space<vmem>>, vector<1x64x32xf32>
    %100 = vector.shape_cast %99 : vector<1x64x32xf32> to vector<64x32xf32>
    %cst_80 = arith.constant dense<0.000000e+00> : vector<8x32xf32>
    %101 = tpu.matmul %78, %100, %cst_80 {dimension_numbers = #tpu.dot_dimension_numbers<[1], [0], [0], [1], [0, 0, 1, 1], [], []>} : vector<8x64xf32>, vector<64x32xf32>, vector<8x32xf32> -> vector<8x32xf32>
    %c2_81 = arith.constant 2 : index
    %c0_82 = arith.constant 0 : index
    %c0_83 = arith.constant 0 : index
    %102 = vector.load %arg13[%c2_81, %c0_82, %c0_83] : memref<8x1x32xf32, #tpu.memory_space<vmem>>, vector<1x1x32xf32>
    %103 = vector.shape_cast %102 : vector<1x1x32xf32> to vector<1x32xf32>
    %104 = vector.broadcast %103 : vector<1x32xf32> to vector<8x32xf32>
    %105 = arith.addf %101, %104 : vector<8x32xf32>
    %cst_84 = arith.constant 0.000000e+00 : f32
    %106 = vector.broadcast %cst_84 : f32 to vector<8x32xf32>
    %107 = arith.maximumf %105, %106 : vector<8x32xf32>
    %c16 = arith.constant 16 : index
    %c0_85 = arith.constant 0 : index
    %108 = vector.load %arg20[%c16, %c0_85] : memref<64x32xf32, #tpu.memory_space<vmem>>, vector<8x32xf32>
    tpu.vector_store %arg20[%c16, %c0_85], %107 {strides = array<i32>} : memref<64x32xf32, #tpu.memory_space<vmem>>, vector<8x32xf32>,
    %c3_86 = arith.constant 3 : index
    %c0_87 = arith.constant 0 : index
    %c0_88 = arith.constant 0 : index
    %109 = vector.load %arg12[%c3_86, %c0_87, %c0_88] : memref<8x64x32xf32, #tpu.memory_space<vmem>>, vector<1x64x32xf32>
    %110 = vector.shape_cast %109 : vector<1x64x32xf32> to vector<64x32xf32>
    %cst_89 = arith.constant dense<0.000000e+00> : vector<8x32xf32>
    %111 = tpu.matmul %78, %110, %cst_89 {dimension_numbers = #tpu.dot_dimension_numbers<[1], [0], [0], [1], [0, 0, 1, 1], [], []>} : vector<8x64xf32>, vector<64x32xf32>, vector<8x32xf32> -> vector<8x32xf32>
    %c3_90 = arith.constant 3 : index
    %c0_91 = arith.constant 0 : index
    %c0_92 = arith.constant 0 : index
    %112 = vector.load %arg13[%c3_90, %c0_91, %c0_92] : memref<8x1x32xf32, #tpu.memory_space<vmem>>, vector<1x1x32xf32>
    %113 = vector.shape_cast %112 : vector<1x1x32xf32> to vector<1x32xf32>
    %114 = vector.broadcast %113 : vector<1x32xf32> to vector<8x32xf32>
    %115 = arith.addf %111, %114 : vector<8x32xf32>
    %cst_93 = arith.constant 0.000000e+00 : f32
    %116 = vector.broadcast %cst_93 : f32 to vector<8x32xf32>
    %117 = arith.maximumf %115, %116 : vector<8x32xf32>
    %c24 = arith.constant 24 : index
    %c0_94 = arith.constant 0 : index
    %118 = vector.load %arg20[%c24, %c0_94] : memref<64x32xf32, #tpu.memory_space<vmem>>, vector<8x32xf32>
    tpu.vector_store %arg20[%c24, %c0_94], %117 {strides = array<i32>} : memref<64x32xf32, #tpu.memory_space<vmem>>, vector<8x32xf32>,
    %c4_95 = arith.constant 4 : index
    %c0_96 = arith.constant 0 : index
    %c0_97 = arith.constant 0 : index
    %119 = vector.load %arg12[%c4_95, %c0_96, %c0_97] : memref<8x64x32xf32, #tpu.memory_space<vmem>>, vector<1x64x32xf32>
    %120 = vector.shape_cast %119 : vector<1x64x32xf32> to vector<64x32xf32>
    %cst_98 = arith.constant dense<0.000000e+00> : vector<8x32xf32>
    %121 = tpu.matmul %78, %120, %cst_98 {dimension_numbers = #tpu.dot_dimension_numbers<[1], [0], [0], [1], [0, 0, 1, 1], [], []>} : vector<8x64xf32>, vector<64x32xf32>, vector<8x32xf32> -> vector<8x32xf32>
    %c4_99 = arith.constant 4 : index
    %c0_100 = arith.constant 0 : index
    %c0_101 = arith.constant 0 : index
    %122 = vector.load %arg13[%c4_99, %c0_100, %c0_101] : memref<8x1x32xf32, #tpu.memory_space<vmem>>, vector<1x1x32xf32>
    %123 = vector.shape_cast %122 : vector<1x1x32xf32> to vector<1x32xf32>
    %124 = vector.broadcast %123 : vector<1x32xf32> to vector<8x32xf32>
    %125 = arith.addf %121, %124 : vector<8x32xf32>
    %cst_102 = arith.constant 0.000000e+00 : f32
    %126 = vector.broadcast %cst_102 : f32 to vector<8x32xf32>
    %127 = arith.maximumf %125, %126 : vector<8x32xf32>
    %c32 = arith.constant 32 : index
    %c0_103 = arith.constant 0 : index
    %128 = vector.load %arg20[%c32, %c0_103] : memref<64x32xf32, #tpu.memory_space<vmem>>, vector<8x32xf32>
    tpu.vector_store %arg20[%c32, %c0_103], %127 {strides = array<i32>} : memref<64x32xf32, #tpu.memory_space<vmem>>, vector<8x32xf32>,
    %c5_104 = arith.constant 5 : index
    %c0_105 = arith.constant 0 : index
    %c0_106 = arith.constant 0 : index
    %129 = vector.load %arg12[%c5_104, %c0_105, %c0_106] : memref<8x64x32xf32, #tpu.memory_space<vmem>>, vector<1x64x32xf32>
    %130 = vector.shape_cast %129 : vector<1x64x32xf32> to vector<64x32xf32>
    %cst_107 = arith.constant dense<0.000000e+00> : vector<8x32xf32>
    %131 = tpu.matmul %78, %130, %cst_107 {dimension_numbers = #tpu.dot_dimension_numbers<[1], [0], [0], [1], [0, 0, 1, 1], [], []>} : vector<8x64xf32>, vector<64x32xf32>, vector<8x32xf32> -> vector<8x32xf32>
    %c5_108 = arith.constant 5 : index
    %c0_109 = arith.constant 0 : index
    %c0_110 = arith.constant 0 : index
    %132 = vector.load %arg13[%c5_108, %c0_109, %c0_110] : memref<8x1x32xf32, #tpu.memory_space<vmem>>, vector<1x1x32xf32>
    %133 = vector.shape_cast %132 : vector<1x1x32xf32> to vector<1x32xf32>
    %134 = vector.broadcast %133 : vector<1x32xf32> to vector<8x32xf32>
    %135 = arith.addf %131, %134 : vector<8x32xf32>
    %cst_111 = arith.constant 0.000000e+00 : f32
    %136 = vector.broadcast %cst_111 : f32 to vector<8x32xf32>
    %137 = arith.maximumf %135, %136 : vector<8x32xf32>
    %c40 = arith.constant 40 : index
    %c0_112 = arith.constant 0 : index
    %138 = vector.load %arg20[%c40, %c0_112] : memref<64x32xf32, #tpu.memory_space<vmem>>, vector<8x32xf32>
    tpu.vector_store %arg20[%c40, %c0_112], %137 {strides = array<i32>} : memref<64x32xf32, #tpu.memory_space<vmem>>, vector<8x32xf32>,
    %c6_113 = arith.constant 6 : index
    %c0_114 = arith.constant 0 : index
    %c0_115 = arith.constant 0 : index
    %139 = vector.load %arg12[%c6_113, %c0_114, %c0_115] : memref<8x64x32xf32, #tpu.memory_space<vmem>>, vector<1x64x32xf32>
    %140 = vector.shape_cast %139 : vector<1x64x32xf32> to vector<64x32xf32>
    %cst_116 = arith.constant dense<0.000000e+00> : vector<8x32xf32>
    %141 = tpu.matmul %78, %140, %cst_116 {dimension_numbers = #tpu.dot_dimension_numbers<[1], [0], [0], [1], [0, 0, 1, 1], [], []>} : vector<8x64xf32>, vector<64x32xf32>, vector<8x32xf32> -> vector<8x32xf32>
    %c6_117 = arith.constant 6 : index
    %c0_118 = arith.constant 0 : index
    %c0_119 = arith.constant 0 : index
    %142 = vector.load %arg13[%c6_117, %c0_118, %c0_119] : memref<8x1x32xf32, #tpu.memory_space<vmem>>, vector<1x1x32xf32>
    %143 = vector.shape_cast %142 : vector<1x1x32xf32> to vector<1x32xf32>
    %144 = vector.broadcast %143 : vector<1x32xf32> to vector<8x32xf32>
    %145 = arith.addf %141, %144 : vector<8x32xf32>
    %cst_120 = arith.constant 0.000000e+00 : f32
    %146 = vector.broadcast %cst_120 : f32 to vector<8x32xf32>
    %147 = arith.maximumf %145, %146 : vector<8x32xf32>
    %c48 = arith.constant 48 : index
    %c0_121 = arith.constant 0 : index
    %148 = vector.load %arg20[%c48, %c0_121] : memref<64x32xf32, #tpu.memory_space<vmem>>, vector<8x32xf32>
    tpu.vector_store %arg20[%c48, %c0_121], %147 {strides = array<i32>} : memref<64x32xf32, #tpu.memory_space<vmem>>, vector<8x32xf32>,
    %c7_122 = arith.constant 7 : index
    %c0_123 = arith.constant 0 : index
    %c0_124 = arith.constant 0 : index
    %149 = vector.load %arg12[%c7_122, %c0_123, %c0_124] : memref<8x64x32xf32, #tpu.memory_space<vmem>>, vector<1x64x32xf32>
    %150 = vector.shape_cast %149 : vector<1x64x32xf32> to vector<64x32xf32>
    %cst_125 = arith.constant dense<0.000000e+00> : vector<8x32xf32>
    %151 = tpu.matmul %78, %150, %cst_125 {dimension_numbers = #tpu.dot_dimension_numbers<[1], [0], [0], [1], [0, 0, 1, 1], [], []>} : vector<8x64xf32>, vector<64x32xf32>, vector<8x32xf32> -> vector<8x32xf32>
    %c7_126 = arith.constant 7 : index
    %c0_127 = arith.constant 0 : index
    %c0_128 = arith.constant 0 : index
    %152 = vector.load %arg13[%c7_126, %c0_127, %c0_128] : memref<8x1x32xf32, #tpu.memory_space<vmem>>, vector<1x1x32xf32>
    %153 = vector.shape_cast %152 : vector<1x1x32xf32> to vector<1x32xf32>
    %154 = vector.broadcast %153 : vector<1x32xf32> to vector<8x32xf32>
    %155 = arith.addf %151, %154 : vector<8x32xf32>
    %cst_129 = arith.constant 0.000000e+00 : f32
    %156 = vector.broadcast %cst_129 : f32 to vector<8x32xf32>
    %157 = arith.maximumf %155, %156 : vector<8x32xf32>
    %c56 = arith.constant 56 : index
    %c0_130 = arith.constant 0 : index
    %158 = vector.load %arg20[%c56, %c0_130] : memref<64x32xf32, #tpu.memory_space<vmem>>, vector<8x32xf32>
    tpu.vector_store %arg20[%c56, %c0_130], %157 {strides = array<i32>} : memref<64x32xf32, #tpu.memory_space<vmem>>, vector<8x32xf32>,
    %c0_131 = arith.constant 0 : index
    %c0_132 = arith.constant 0 : index
    %159 = vector.load %arg20[%c0_131, %c0_132] : memref<64x32xf32, #tpu.memory_space<vmem>>, vector<64x32xf32>
    %c0_133 = arith.constant 0 : index
    %c0_134 = arith.constant 0 : index
    %160 = vector.load %arg14[%c0_133, %c0_134] : memref<32x32xf32, #tpu.memory_space<vmem>>, vector<32x32xf32>
    %cst_135 = arith.constant dense<0.000000e+00> : vector<64x32xf32>
    %161 = tpu.matmul %159, %160, %cst_135 {dimension_numbers = #tpu.dot_dimension_numbers<[1], [0], [0], [1], [0, 0, 1, 1], [], []>} : vector<64x32xf32>, vector<32x32xf32>, vector<64x32xf32> -> vector<64x32xf32>
    %c0_136 = arith.constant 0 : index
    %c0_137 = arith.constant 0 : index
    %162 = vector.load %arg15[%c0_136, %c0_137] : memref<1x32xf32, #tpu.memory_space<vmem>>, vector<1x32xf32>
    %163 = vector.broadcast %162 : vector<1x32xf32> to vector<64x32xf32>
    %164 = arith.addf %161, %163 : vector<64x32xf32>
    %c0_138 = arith.constant 0 : index
    %c0_139 = arith.constant 0 : index
    %165 = vector.load %arg17[%c0_138, %c0_139] : memref<64x32xf32, #tpu.memory_space<vmem>>, vector<64x32xf32>
    tpu.vector_store %arg17[%c0_138, %c0_139], %164 {strides = array<i32>} : memref<64x32xf32, #tpu.memory_space<vmem>>, vector<64x32xf32>,
    return
  }
  func.func @transform_0(%arg0: i32) -> (i32, i32) {
    %c0_i32 = arith.constant 0 : i32
    %c0_i32_0 = arith.constant 0 : i32
    %c0_i32_1 = arith.constant 0 : i32
    return %c0_i32, %c0_i32_0 : i32, i32
  }
  func.func @transform_1(%arg0: i32) -> (i32, i32) {
    %c0_i32 = arith.constant 0 : i32
    %c0_i32_0 = arith.constant 0 : i32
    %c0_i32_1 = arith.constant 0 : i32
    return %c0_i32, %c0_i32_0 : i32, i32
  }
  func.func @transform_2(%arg0: i32) -> (i32, i32) {
    %c0_i32 = arith.constant 0 : i32
    %c0_i32_0 = arith.constant 0 : i32
    %c0_i32_1 = arith.constant 0 : i32
    return %c0_i32, %c0_i32_0 : i32, i32
  }
  func.func @transform_3(%arg0: i32) -> (i32, i32, i32) {
    %c0_i32 = arith.constant 0 : i32
    %c0_i32_0 = arith.constant 0 : i32
    %c0_i32_1 = arith.constant 0 : i32
    %c0_i32_2 = arith.constant 0 : i32
    return %c0_i32, %c0_i32_0, %c0_i32_1 : i32, i32, i32
  }
  func.func @transform_4(%arg0: i32) -> (i32, i32) {
    %c0_i32 = arith.constant 0 : i32
    %c0_i32_0 = arith.constant 0 : i32
    %c0_i32_1 = arith.constant 0 : i32
    return %c0_i32, %c0_i32_0 : i32, i32
  }
  func.func @transform_5(%arg0: i32) -> (i32, i32) {
    %c0_i32 = arith.constant 0 : i32
    %c0_i32_0 = arith.constant 0 : i32
    %c0_i32_1 = arith.constant 0 : i32
    return %c0_i32, %c0_i32_0 : i32, i32
  }
  func.func @transform_6(%arg0: i32) -> (i32, i32) {
    %c0_i32 = arith.constant 0 : i32
    %c0_i32_0 = arith.constant 0 : i32
    %c0_i32_1 = arith.constant 0 : i32
    return %c0_i32, %c0_i32_0 : i32, i32
  }
  func.func @transform_7(%arg0: i32) -> (i32, i32) {
    %c0_i32 = arith.constant 0 : i32
    %c0_i32_0 = arith.constant 0 : i32
    %c0_i32_1 = arith.constant 0 : i32
    return %c0_i32, %c0_i32_0 : i32, i32
  }
  func.func @transform_8(%arg0: i32) -> (i32, i32) {
    %c0_i32 = arith.constant 0 : i32
    %c0_i32_0 = arith.constant 0 : i32
    %c0_i32_1 = arith.constant 0 : i32
    return %c0_i32, %c0_i32_0 : i32, i32
  }
  func.func @transform_9(%arg0: i32) -> (i32, i32) {
    %c0_i32 = arith.constant 0 : i32
    %c0_i32_0 = arith.constant 0 : i32
    %c0_i32_1 = arith.constant 0 : i32
    return %c0_i32, %c0_i32_0 : i32, i32
  }
  func.func @transform_10(%arg0: i32) -> (i32, i32) {
    %c0_i32 = arith.constant 0 : i32
    %c0_i32_0 = arith.constant 0 : i32
    %c0_i32_1 = arith.constant 0 : i32
    return %c0_i32, %c0_i32_0 : i32, i32
  }
  func.func @transform_11(%arg0: i32) -> (i32, i32, i32) {
    %c0_i32 = arith.constant 0 : i32
    %c0_i32_0 = arith.constant 0 : i32
    %c0_i32_1 = arith.constant 0 : i32
    %c0_i32_2 = arith.constant 0 : i32
    return %c0_i32, %c0_i32_0, %c0_i32_1 : i32, i32, i32
  }
  func.func @transform_12(%arg0: i32) -> (i32, i32, i32) {
    %c0_i32 = arith.constant 0 : i32
    %c0_i32_0 = arith.constant 0 : i32
    %c0_i32_1 = arith.constant 0 : i32
    %c0_i32_2 = arith.constant 0 : i32
    return %c0_i32, %c0_i32_0, %c0_i32_1 : i32, i32, i32
  }
  func.func @transform_13(%arg0: i32) -> (i32, i32) {
    %c0_i32 = arith.constant 0 : i32
    %c0_i32_0 = arith.constant 0 : i32
    %c0_i32_1 = arith.constant 0 : i32
    return %c0_i32, %c0_i32_0 : i32, i32
  }
  func.func @transform_14(%arg0: i32) -> (i32, i32) {
    %c0_i32 = arith.constant 0 : i32
    %c0_i32_0 = arith.constant 0 : i32
    %c0_i32_1 = arith.constant 0 : i32
    return %c0_i32, %c0_i32_0 : i32, i32
  }
  func.func @transform_15(%arg0: i32) -> (i32, i32) {
    %c0_i32 = arith.constant 0 : i32
    %c0_i32_0 = arith.constant 0 : i32
    %c0_i32_1 = arith.constant 0 : i32
    return %c0_i32, %c0_i32_0 : i32, i32
  }
  func.func @transform_16(%arg0: i32) -> (i32, i32) {
    %c0_i32 = arith.constant 0 : i32
    %c0_i32_0 = arith.constant 0 : i32
    %c0_i32_1 = arith.constant 0 : i32
    return %c0_i32, %c0_i32_0 : i32, i32
  }
  func.func @transform_17(%arg0: i32) -> (i32, i32) {
    %c0_i32 = arith.constant 0 : i32
    %c0_i32_0 = arith.constant 0 : i32
    %c0_i32_1 = arith.constant 0 : i32
    return %c0_i32, %c0_i32_0 : i32, i32
  }
  func.func @transform_18(%arg0: i32) -> (i32, i32) {
    %c0_i32 = arith.constant 0 : i32
    %c0_i32_0 = arith.constant 0 : i32
    %c0_i32_1 = arith.constant 0 : i32
    return %c0_i32, %c0_i32_0 : i32, i32
  }
}

</mosaic_0001>

<llo_original>
// kernel: _lambda_.1
$region0: #{_lambda_.1}
  #allocation0 [shape = 'u32[]', space=smem, size = 0x4, offset = 0x4, fixed_abs, tag = 'smem constant byte address 0x4 - core index']
  #allocation1 [shape = 'u32[144,128]{1,0:T(1,128)}', space=vmem, size = 0x12000, scoped, tag = 'internal scratch']
  #allocation2 [shape = 'f32[64,32]{1,0:T(8,128)}', space=vmem, size = 0x8000, scoped, tag = 'scratch operand']
  %s0 = inlined_call_operand.vmem [shape: f32[64,32], index: 0, kind: input, shape index: {}]
  %s1 = inlined_call_operand.vmem [shape: f32[32,32], index: 1, kind: input, shape index: {}]
  %s2 = inlined_call_operand.vmem [shape: f32[1,32], index: 2, kind: input, shape index: {}]
  %s3 = inlined_call_operand.vmem [shape: f32[8,32,64], index: 3, kind: input, shape index: {}]
  %s4 = inlined_call_operand.vmem [shape: f32[1,64], index: 4, kind: input, shape index: {}]
  %s5 = inlined_call_operand.vmem [shape: f32[64,19], index: 5, kind: input, shape index: {}]
  %s6 = inlined_call_operand.vmem [shape: f32[1,19], index: 6, kind: input, shape index: {}]
  %s7 = inlined_call_operand.vmem [shape: f32[64,19], index: 7, kind: input, shape index: {}]
  %s8 = inlined_call_operand.vmem [shape: f32[1,19], index: 8, kind: input, shape index: {}]
  %s9 = inlined_call_operand.vmem [shape: f32[19,64], index: 9, kind: input, shape index: {}]
  %s10 = inlined_call_operand.vmem [shape: f32[1,64], index: 10, kind: input, shape index: {}]
  %s11 = inlined_call_operand.vmem [shape: f32[8,64,32], index: 11, kind: input, shape index: {}]
  %s12 = inlined_call_operand.vmem [shape: f32[8,1,32], index: 12, kind: input, shape index: {}]
  %s13 = inlined_call_operand.vmem [shape: f32[32,32], index: 13, kind: input, shape index: {}]
  %s14 = inlined_call_operand.vmem [shape: f32[1,32], index: 14, kind: input, shape index: {}]
  %s15 = inlined_call_operand.vmem [shape: f32[8,19], index: 15, kind: input, shape index: {}]
  %s16 = inlined_call_operand.vmem [shape: f32[64,32], index: 16, kind: output, shape index: {0}]
  %s17 = inlined_call_operand.vmem [shape: f32[8,19], index: 17, kind: output, shape index: {1}]
  %s18 = inlined_call_operand.vmem [shape: f32[8,19], index: 18, kind: output, shape index: {2}]
  %19 = xla_tuple %s16, %s17, %s18
  %s20 = sld [smem:[#allocation0]]
  $region90: #{_lambda_.1} parent=0
    _
  %s22 = ssub.s32 1, %s20
  %s23 = scalar_select 0, %s22, %s20
  // Predicated region
  $region2: #{_lambda_.1} parent=0 // pred_check
    _
  $region3: #{_lambda_.1} parent=0 // pred_check_branch
    %25 = sbr.rel (0) target = $region5
  $region4: #{_lambda_.1} parent=0 // pred_region
    _
  $region5: #{_lambda_.1} parent=0 // pred_fallthru
    _
  // Predicated region
  $region6: #{_lambda_.1} parent=0 // pred_check
    _
  $region7: #{_lambda_.1} parent=0 // pred_check_branch
    %27 = sbr.rel (0) target = $region9
  $region8: #{_lambda_.1} parent=0 // pred_region
    _
  $region9: #{_lambda_.1} parent=0 // pred_fallthru
    _
  // Predicated region
  $region10: #{_lambda_.1} parent=0 // pred_check
    _
  $region11: #{_lambda_.1} parent=0 // pred_check_branch
    %29 = sbr.rel (0) target = $region13
  $region12: #{_lambda_.1} parent=0 // pred_region
    _
  $region13: #{_lambda_.1} parent=0 // pred_fallthru
    _
  // Predicated region
  $region14: #{_lambda_.1} parent=0 // pred_check
    _
  $region15: #{_lambda_.1} parent=0 // pred_check_branch
    %31 = sbr.rel (0) target = $region17
  $region16: #{_lambda_.1} parent=0 // pred_region
    _
  $region17: #{_lambda_.1} parent=0 // pred_fallthru
    _
  // Predicated region
  $region18: #{_lambda_.1} parent=0 // pred_check
    _
  $region19: #{_lambda_.1} parent=0 // pred_check_branch
    %33 = sbr.rel (0) target = $region21
  $region20: #{_lambda_.1} parent=0 // pred_region
    _
  $region21: #{_lambda_.1} parent=0 // pred_fallthru
    _
  // Predicated region
  $region22: #{_lambda_.1} parent=0 // pred_check
    _
  $region23: #{_lambda_.1} parent=0 // pred_check_branch
    %35 = sbr.rel (0) target = $region25
  $region24: #{_lambda_.1} parent=0 // pred_region
    _
  $region25: #{_lambda_.1} parent=0 // pred_fallthru
    _
  // Predicated region
  $region26: #{_lambda_.1} parent=0 // pred_check
    _
  $region27: #{_lambda_.1} parent=0 // pred_check_branch
    %37 = sbr.rel (0) target = $region29
  $region28: #{_lambda_.1} parent=0 // pred_region
    _
  $region29: #{_lambda_.1} parent=0 // pred_fallthru
    _
  // Predicated region
  $region30: #{_lambda_.1} parent=0 // pred_check
    _
  $region31: #{_lambda_.1} parent=0 // pred_check_branch
    %39 = sbr.rel (0) target = $region33
  $region32: #{_lambda_.1} parent=0 // pred_region
    _
  $region33: #{_lambda_.1} parent=0 // pred_fallthru
    _
  // Predicated region
  $region34: #{_lambda_.1} parent=0 // pred_check
    _
  $region35: #{_lambda_.1} parent=0 // pred_check_branch
    %41 = sbr.rel (0) target = $region37
  $region36: #{_lambda_.1} parent=0 // pred_region
    _
  $region37: #{_lambda_.1} parent=0 // pred_fallthru
    _
  // Predicated region
  $region38: #{_lambda_.1} parent=0 // pred_check
    _
  $region39: #{_lambda_.1} parent=0 // pred_check_branch
    %43 = sbr.rel (0) target = $region41
  $region40: #{_lambda_.1} parent=0 // pred_region
    _
  $region41: #{_lambda_.1} parent=0 // pred_fallthru
    _
  // Predicated region
  $region42: #{_lambda_.1} parent=0 // pred_check
    _
  $region43: #{_lambda_.1} parent=0 // pred_check_branch
    %45 = sbr.rel (0) target = $region45
  $region44: #{_lambda_.1} parent=0 // pred_region
    _
  $region45: #{_lambda_.1} parent=0 // pred_fallthru
    _
  // Predicated region
  $region46: #{_lambda_.1} parent=0 // pred_check
    _
  $region47: #{_lambda_.1} parent=0 // pred_check_branch
    %47 = sbr.rel (0) target = $region49
  $region48: #{_lambda_.1} parent=0 // pred_region
    _
  $region49: #{_lambda_.1} parent=0 // pred_fallthru
    _
  // Predicated region
  $region50: #{_lambda_.1} parent=0 // pred_check
    _
  $region51: #{_lambda_.1} parent=0 // pred_check_branch
    %49 = sbr.rel (0) target = $region53
  $region52: #{_lambda_.1} parent=0 // pred_region
    _
  $region53: #{_lambda_.1} parent=0 // pred_fallthru
    _
  // Predicated region
  $region54: #{_lambda_.1} parent=0 // pred_check
    _
  $region55: #{_lambda_.1} parent=0 // pred_check_branch
    %51 = sbr.rel (0) target = $region57
  $region56: #{_lambda_.1} parent=0 // pred_region
    _
  $region57: #{_lambda_.1} parent=0 // pred_fallthru
    _
  // Predicated region
  $region58: #{_lambda_.1} parent=0 // pred_check
    _
  $region59: #{_lambda_.1} parent=0 // pred_check_branch
    %53 = sbr.rel (0) target = $region61
  $region60: #{_lambda_.1} parent=0 // pred_region
    _
  $region61: #{_lambda_.1} parent=0 // pred_fallthru
    _
  // Predicated region
  $region62: #{_lambda_.1} parent=0 // pred_check
    _
  $region63: #{_lambda_.1} parent=0 // pred_check_branch
    %55 = sbr.rel (0) target = $region65
  $region64: #{_lambda_.1} parent=0 // pred_region
    _
  $region65: #{_lambda_.1} parent=0 // pred_fallthru
    _
  %v56 = vld [vmem:[%s0] sm:$0xff]
  %v57 = vld [vmem:[%s0 + $0x8] sm:$0xff]
  %v58 = vld [vmem:[%s0 + $0x10] sm:$0xff]
  %v59 = vld [vmem:[%s0 + $0x18] sm:$0xff]
  %v60 = vld [vmem:[%s0 + $0x20] sm:$0xff]
  %v61 = vld [vmem:[%s0 + $0x28] sm:$0xff]
  %v62 = vld [vmem:[%s0 + $0x30] sm:$0xff]
  %v63 = vld [vmem:[%s0 + $0x38] sm:$0xff]
  %v64 = vld [vmem:[%s1] sm:$0xff]
  %v65 = vld [vmem:[%s1 + $0x8] sm:$0xff]
  %v66 = vld [vmem:[%s1 + $0x10] sm:$0xff]
  %v67 = vld [vmem:[%s1 + $0x18] sm:$0xff]
  %v68 = vld [vmem:[%s2] sm:$0x1]
  %v70 = vlaneseq
  %v71 = vshrl.u32 %v70, 7
  %v72 = vsub.s32 0, %v71
  %v73 = vrot.slane %v68, %v72
  %vm75 = vcmask 261120
  %v77 = vsel %vm75, %v56, 0
  %v80 = vsel %vm75, %v57, 0
  %v83 = vsel %vm75, %v58, 0
  %v86 = vsel %vm75, %v59, 0
  %v89 = vsel %vm75, %v60, 0
  %v92 = vsel %vm75, %v61, 0
  %v95 = vsel %vm75, %v62, 0
  %v98 = vsel %vm75, %v63, 0
  %100 = vmatprep.subr.mxu0 0.0
  %101 = vmatpush1.msra.mxu0 0.0
  %102 = vmatprep.subr.mxu0 0.0
  %103 = vmatpush1.msra.mxu0 0.0
  %104 = vmatprep.subr.mxu0 0.0
  %105 = vmatpush1.msra.mxu0 0.0
  %106 = vmatprep.subr.mxu0 0.0
  %107 = vmatpush1.msra.mxu0 0.0
  %108 = vmatprep.subr.mxu0 0.0
  %109 = vmatpush1.msra.mxu0 0.0
  %110 = vmatprep.subr.mxu0 0.0
  %111 = vmatpush1.msra.mxu0 0.0
  %112 = vmatprep.subr.mxu0 0.0
  %113 = vmatpush1.msra.mxu0 0.0
  %114 = vmatprep.subr.mxu0 0.0
  %115 = vmatpush1.msra.mxu0 0.0
  %116 = vmatprep.subr.mxu0 0.0
  %117 = vmatpush1.msra.mxu0 0.0
  %118 = vmatprep.subr.mxu0 0.0
  %119 = vmatpush1.msra.mxu0 0.0
  %120 = vmatprep.subr.mxu0 0.0
  %121 = vmatpush1.msra.mxu0 0.0
  %122 = vmatprep.subr.mxu0 0.0
  %123 = vmatpush1.msra.mxu0 0.0
  %124 = vmatprep.subr.mxu0 0.0
  %125 = vmatpush1.msra.mxu0 %v67
  %126 = vmatprep.subr.mxu0 0.0
  %127 = vmatpush1.msra.mxu0 %v66
  %128 = vmatprep.subr.mxu0 0.0
  %129 = vmatpush1.msra.mxu0 %v65
  %130 = vmatprep.subr.mxu0 0.0
  %131 = vmatpush1.msra.mxu0 %v64
  %132 = vmatprep.subr.mxu0 0.0
  %133 = vmatpush2.msra.mxu0 0.0
  %134 = vmatprep.subr.mxu0 0.0
  %135 = vmatpush2.msra.mxu0 0.0
  %136 = vmatprep.subr.mxu0 0.0
  %137 = vmatpush2.msra.mxu0 0.0
  %138 = vmatprep.subr.mxu0 0.0
  %139 = vmatpush2.msra.mxu0 0.0
  %140 = vmatprep.subr.mxu0 0.0
  %141 = vmatpush2.msra.mxu0 0.0
  %142 = vmatprep.subr.mxu0 0.0
  %143 = vmatpush2.msra.mxu0 0.0
  %144 = vmatprep.subr.mxu0 0.0
  %145 = vmatpush2.msra.mxu0 0.0
  %146 = vmatprep.subr.mxu0 0.0
  %147 = vmatpush2.msra.mxu0 0.0
  %148 = vmatprep.subr.mxu0 0.0
  %149 = vmatpush2.msra.mxu0 0.0
  %150 = vmatprep.subr.mxu0 0.0
  %151 = vmatpush2.msra.mxu0 0.0
  %152 = vmatprep.subr.mxu0 0.0
  %153 = vmatpush2.msra.mxu0 0.0
  %154 = vmatprep.subr.mxu0 0.0
  %155 = vmatpush2.msra.mxu0 0.0
  %156 = vmatprep.subr.mxu0 0.0
  %157 = vmatpush2.msra.mxu0 0.0
  %158 = vmatprep.subr.mxu0 0.0
  %159 = vmatpush2.msra.mxu0 0.0
  %160 = vmatprep.subr.mxu0 0.0
  %161 = vmatpush2.msra.mxu0 0.0
  %162 = vmatprep.subr.mxu0 0.0
  %163 = vmatpush2.msra.mxu0 0.0
  %164 = vmatprep.mubr.f32.mxu0 0.0
  %165 = vmatmul.mubr.f32.gmra.mxu0 %v77
  %v166 = vpop.f32.mrf.mxu0
  %v167 = vadd.f32 %v73, %v166
  %v168 = vpop.f32.mrf.mxu0
  %169 = vmatprep.mubr.f32.mxu0 0.0
  %170 = vmatmul.mubr.f32.gmra.mxu0 %v80
  %v171 = vpop.f32.mrf.mxu0
  %v172 = vadd.f32 %v73, %v171
  %v173 = vpop.f32.mrf.mxu0
  %174 = vmatprep.mubr.f32.mxu0 0.0
  %175 = vmatmul.mubr.f32.gmra.mxu0 %v83
  %v176 = vpop.f32.mrf.mxu0
  %v177 = vadd.f32 %v73, %v176
  %v178 = vpop.f32.mrf.mxu0
  %179 = vmatprep.mubr.f32.mxu0 0.0
  %180 = vmatmul.mubr.f32.gmra.mxu0 %v86
  %v181 = vpop.f32.mrf.mxu0
  %v182 = vadd.f32 %v73, %v181
  %v183 = vpop.f32.mrf.mxu0
  %184 = vmatprep.mubr.f32.mxu0 0.0
  %185 = vmatmul.mubr.f32.gmra.mxu0 %v89
  %v186 = vpop.f32.mrf.mxu0
  %v187 = vadd.f32 %v73, %v186
  %v188 = vpop.f32.mrf.mxu0
  %189 = vmatprep.mubr.f32.mxu0 0.0
  %190 = vmatmul.mubr.f32.gmra.mxu0 %v92
  %v191 = vpop.f32.mrf.mxu0
  %v192 = vadd.f32 %v73, %v191
  %v193 = vpop.f32.mrf.mxu0
  %194 = vmatprep.mubr.f32.mxu0 0.0
  %195 = vmatmul.mubr.f32.gmra.mxu0 %v95
  %v196 = vpop.f32.mrf.mxu0
  %v197 = vadd.f32 %v73, %v196
  %v198 = vpop.f32.mrf.mxu0
  %199 = vmatprep.mubr.f32.mxu0 0.0
  %200 = vmatmul.mubr.f32.gmra.mxu0 %v98
  %v201 = vpop.f32.mrf.mxu0
  %v202 = vadd.f32 %v73, %v201
  %v203 = vpop.f32.mrf.mxu0
  %204 = vdwg.mxu0
  %v205 = vmax.f32 %v167, 0.0
  %v206 = vmax.f32 %v172, 0.0
  %v207 = vmax.f32 %v177, 0.0
  %v208 = vmax.f32 %v182, 0.0
  %v209 = vmax.f32 %v187, 0.0
  %v210 = vmax.f32 %v192, 0.0
  %v211 = vmax.f32 %v197, 0.0
  %v212 = vmax.f32 %v202, 0.0
  %v213 = vld [vmem:[%s3] sm:$0xff]
  %v214 = vld [vmem:[%s3 + $0x8] sm:$0xff]
  %v215 = vld [vmem:[%s3 + $0x10] sm:$0xff]
  %v216 = vld [vmem:[%s3 + $0x18] sm:$0xff]
  %s217 = scalar_lea.vmem %s3, 32
  %v218 = vld [vmem:[%s217] sm:$0xff]
  %v219 = vld [vmem:[%s217 + $0x8] sm:$0xff]
  %v220 = vld [vmem:[%s217 + $0x10] sm:$0xff]
  %v221 = vld [vmem:[%s217 + $0x18] sm:$0xff]
  %v223 = vsel %vm75, %v206, 0
  %225 = vmatprep.subr.mxu0 0.0
  %226 = vmatpush1.msra.mxu0 0.0
  %227 = vmatprep.subr.mxu0 0.0
  %228 = vmatpush1.msra.mxu0 0.0
  %229 = vmatprep.subr.mxu0 0.0
  %230 = vmatpush1.msra.mxu0 0.0
  %231 = vmatprep.subr.mxu0 0.0
  %232 = vmatpush1.msra.mxu0 0.0
  %233 = vmatprep.subr.mxu0 0.0
  %234 = vmatpush1.msra.mxu0 0.0
  %235 = vmatprep.subr.mxu0 0.0
  %236 = vmatpush1.msra.mxu0 0.0
  %237 = vmatprep.subr.mxu0 0.0
  %238 = vmatpush1.msra.mxu0 0.0
  %239 = vmatprep.subr.mxu0 0.0
  %240 = vmatpush1.msra.mxu0 0.0
  %241 = vmatprep.subr.mxu0 0.0
  %242 = vmatpush1.msra.mxu0 0.0
  %243 = vmatprep.subr.mxu0 0.0
  %244 = vmatpush1.msra.mxu0 0.0
  %245 = vmatprep.subr.mxu0 0.0
  %246 = vmatpush1.msra.mxu0 0.0
  %247 = vmatprep.subr.mxu0 0.0
  %248 = vmatpush1.msra.mxu0 0.0
  %249 = vmatprep.subr.mxu0 0.0
  %250 = vmatpush1.msra.mxu0 %v221
  %251 = vmatprep.subr.mxu0 0.0
  %252 = vmatpush1.msra.mxu0 %v220
  %253 = vmatprep.subr.mxu0 0.0
  %254 = vmatpush1.msra.mxu0 %v219
  %255 = vmatprep.subr.mxu0 0.0
  %256 = vmatpush1.msra.mxu0 %v218
  %257 = vmatprep.subr.mxu0 0.0
  %258 = vmatpush2.msra.mxu0 0.0
  %259 = vmatprep.subr.mxu0 0.0
  %260 = vmatpush2.msra.mxu0 0.0
  %261 = vmatprep.subr.mxu0 0.0
  %262 = vmatpush2.msra.mxu0 0.0
  %263 = vmatprep.subr.mxu0 0.0
  %264 = vmatpush2.msra.mxu0 0.0
  %265 = vmatprep.subr.mxu0 0.0
  %266 = vmatpush2.msra.mxu0 0.0
  %267 = vmatprep.subr.mxu0 0.0
  %268 = vmatpush2.msra.mxu0 0.0
  %269 = vmatprep.subr.mxu0 0.0
  %270 = vmatpush2.msra.mxu0 0.0
  %271 = vmatprep.subr.mxu0 0.0
  %272 = vmatpush2.msra.mxu0 0.0
  %273 = vmatprep.subr.mxu0 0.0
  %274 = vmatpush2.msra.mxu0 0.0
  %275 = vmatprep.subr.mxu0 0.0
  %276 = vmatpush2.msra.mxu0 0.0
  %277 = vmatprep.subr.mxu0 0.0
  %278 = vmatpush2.msra.mxu0 0.0
  %279 = vmatprep.subr.mxu0 0.0
  %280 = vmatpush2.msra.mxu0 0.0
  %281 = vmatprep.subr.mxu0 0.0
  %282 = vmatpush2.msra.mxu0 0.0
  %283 = vmatprep.subr.mxu0 0.0
  %284 = vmatpush2.msra.mxu0 0.0
  %285 = vmatprep.subr.mxu0 0.0
  %286 = vmatpush2.msra.mxu0 0.0
  %287 = vmatprep.subr.mxu0 0.0
  %288 = vmatpush2.msra.mxu0 0.0
  %289 = vmatprep.mubr.f32.mxu0 0.0
  %290 = vmatmul.mubr.f32.gmra.mxu0 %v223
  %v291 = vpop.f32.mrf.mxu0
  %v292 = vadd.f32 0.0, %v291
  %v293 = vpop.f32.mrf.mxu0
  %294 = vdwg.mxu0
  %v296 = vsel %vm75, %v205, 0
  %298 = vmatprep.subr.mxu0 0.0
  %299 = vmatpush1.msra.mxu0 0.0
  %300 = vmatprep.subr.mxu0 0.0
  %301 = vmatpush1.msra.mxu0 0.0
  %302 = vmatprep.subr.mxu0 0.0
  %303 = vmatpush1.msra.mxu0 0.0
  %304 = vmatprep.subr.mxu0 0.0
  %305 = vmatpush1.msra.mxu0 0.0
  %306 = vmatprep.subr.mxu0 0.0
  %307 = vmatpush1.msra.mxu0 0.0
  %308 = vmatprep.subr.mxu0 0.0
  %309 = vmatpush1.msra.mxu0 0.0
  %310 = vmatprep.subr.mxu0 0.0
  %311 = vmatpush1.msra.mxu0 0.0
  %312 = vmatprep.subr.mxu0 0.0
  %313 = vmatpush1.msra.mxu0 0.0
  %314 = vmatprep.subr.mxu0 0.0
  %315 = vmatpush1.msra.mxu0 0.0
  %316 = vmatprep.subr.mxu0 0.0
  %317 = vmatpush1.msra.mxu0 0.0
  %318 = vmatprep.subr.mxu0 0.0
  %319 = vmatpush1.msra.mxu0 0.0
  %320 = vmatprep.subr.mxu0 0.0
  %321 = vmatpush1.msra.mxu0 0.0
  %322 = vmatprep.subr.mxu0 0.0
  %323 = vmatpush1.msra.mxu0 %v216
  %324 = vmatprep.subr.mxu0 0.0
  %325 = vmatpush1.msra.mxu0 %v215
  %326 = vmatprep.subr.mxu0 0.0
  %327 = vmatpush1.msra.mxu0 %v214
  %328 = vmatprep.subr.mxu0 0.0
  %329 = vmatpush1.msra.mxu0 %v213
  %330 = vmatprep.subr.mxu0 0.0
  %331 = vmatpush2.msra.mxu0 0.0
  %332 = vmatprep.subr.mxu0 0.0
  %333 = vmatpush2.msra.mxu0 0.0
  %334 = vmatprep.subr.mxu0 0.0
  %335 = vmatpush2.msra.mxu0 0.0
  %336 = vmatprep.subr.mxu0 0.0
  %337 = vmatpush2.msra.mxu0 0.0
  %338 = vmatprep.subr.mxu0 0.0
  %339 = vmatpush2.msra.mxu0 0.0
  %340 = vmatprep.subr.mxu0 0.0
  %341 = vmatpush2.msra.mxu0 0.0
  %342 = vmatprep.subr.mxu0 0.0
  %343 = vmatpush2.msra.mxu0 0.0
  %344 = vmatprep.subr.mxu0 0.0
  %345 = vmatpush2.msra.mxu0 0.0
  %346 = vmatprep.subr.mxu0 0.0
  %347 = vmatpush2.msra.mxu0 0.0
  %348 = vmatprep.subr.mxu0 0.0
  %349 = vmatpush2.msra.mxu0 0.0
  %350 = vmatprep.subr.mxu0 0.0
  %351 = vmatpush2.msra.mxu0 0.0
  %352 = vmatprep.subr.mxu0 0.0
  %353 = vmatpush2.msra.mxu0 0.0
  %354 = vmatprep.subr.mxu0 0.0
  %355 = vmatpush2.msra.mxu0 0.0
  %356 = vmatprep.subr.mxu0 0.0
  %357 = vmatpush2.msra.mxu0 0.0
  %358 = vmatprep.subr.mxu0 0.0
  %359 = vmatpush2.msra.mxu0 0.0
  %360 = vmatprep.subr.mxu0 0.0
  %361 = vmatpush2.msra.mxu0 0.0
  %362 = vmatprep.mubr.f32.mxu0 0.0
  %363 = vmatmul.mubr.f32.gmra.mxu0 %v296
  %v364 = vpop.f32.mrf.mxu0
  %v365 = vadd.f32 %v292, %v364
  %v366 = vpop.f32.mrf.mxu0
  %367 = vdwg.mxu0
  %s368 = scalar_lea.vmem %s3, 64
  %v369 = vld [vmem:[%s368] sm:$0xff]
  %v370 = vld [vmem:[%s368 + $0x8] sm:$0xff]
  %v371 = vld [vmem:[%s368 + $0x10] sm:$0xff]
  %v372 = vld [vmem:[%s368 + $0x18] sm:$0xff]
  %v374 = vsel %vm75, %v207, 0
  %376 = vmatprep.subr.mxu0 0.0
  %377 = vmatpush1.msra.mxu0 0.0
  %378 = vmatprep.subr.mxu0 0.0
  %379 = vmatpush1.msra.mxu0 0.0
  %380 = vmatprep.subr.mxu0 0.0
  %381 = vmatpush1.msra.mxu0 0.0
  %382 = vmatprep.subr.mxu0 0.0
  %383 = vmatpush1.msra.mxu0 0.0
  %384 = vmatprep.subr.mxu0 0.0
  %385 = vmatpush1.msra.mxu0 0.0
  %386 = vmatprep.subr.mxu0 0.0
  %387 = vmatpush1.msra.mxu0 0.0
  %388 = vmatprep.subr.mxu0 0.0
  %389 = vmatpush1.msra.mxu0 0.0
  %390 = vmatprep.subr.mxu0 0.0
  %391 = vmatpush1.msra.mxu0 0.0
  %392 = vmatprep.subr.mxu0 0.0
  %393 = vmatpush1.msra.mxu0 0.0
  %394 = vmatprep.subr.mxu0 0.0
  %395 = vmatpush1.msra.mxu0 0.0
  %396 = vmatprep.subr.mxu0 0.0
  %397 = vmatpush1.msra.mxu0 0.0
  %398 = vmatprep.subr.mxu0 0.0
  %399 = vmatpush1.msra.mxu0 0.0
  %400 = vmatprep.subr.mxu0 0.0
  %401 = vmatpush1.msra.mxu0 %v372
  %402 = vmatprep.subr.mxu0 0.0
  %403 = vmatpush1.msra.mxu0 %v371
  %404 = vmatprep.subr.mxu0 0.0
  %405 = vmatpush1.msra.mxu0 %v370
  %406 = vmatprep.subr.mxu0 0.0
  %407 = vmatpush1.msra.mxu0 %v369
  %408 = vmatprep.subr.mxu0 0.0
  %409 = vmatpush2.msra.mxu0 0.0
  %410 = vmatprep.subr.mxu0 0.0
  %411 = vmatpush2.msra.mxu0 0.0
  %412 = vmatprep.subr.mxu0 0.0
  %413 = vmatpush2.msra.mxu0 0.0
  %414 = vmatprep.subr.mxu0 0.0
  %415 = vmatpush2.msra.mxu0 0.0
  %416 = vmatprep.subr.mxu0 0.0
  %417 = vmatpush2.msra.mxu0 0.0
  %418 = vmatprep.subr.mxu0 0.0
  %419 = vmatpush2.msra.mxu0 0.0
  %420 = vmatprep.subr.mxu0 0.0
  %421 = vmatpush2.msra.mxu0 0.0
  %422 = vmatprep.subr.mxu0 0.0
  %423 = vmatpush2.msra.mxu0 0.0
  %424 = vmatprep.subr.mxu0 0.0
  %425 = vmatpush2.msra.mxu0 0.0
  %426 = vmatprep.subr.mxu0 0.0
  %427 = vmatpush2.msra.mxu0 0.0
  %428 = vmatprep.subr.mxu0 0.0
  %429 = vmatpush2.msra.mxu0 0.0
  %430 = vmatprep.subr.mxu0 0.0
  %431 = vmatpush2.msra.mxu0 0.0
  %432 = vmatprep.subr.mxu0 0.0
  %433 = vmatpush2.msra.mxu0 0.0
  %434 = vmatprep.subr.mxu0 0.0
  %435 = vmatpush2.msra.mxu0 0.0
  %436 = vmatprep.subr.mxu0 0.0
  %437 = vmatpush2.msra.mxu0 0.0
  %438 = vmatprep.subr.mxu0 0.0
  %439 = vmatpush2.msra.mxu0 0.0
  %440 = vmatprep.mubr.f32.mxu0 0.0
  %441 = vmatmul.mubr.f32.gmra.mxu0 %v374
  %v442 = vpop.f32.mrf.mxu0
  %v443 = vadd.f32 0.0, %v442
  %v444 = vpop.f32.mrf.mxu0
  %445 = vdwg.mxu0
  %v446 = vadd.f32 %v365, %v443
  %s447 = scalar_lea.vmem %s3, 96
  %v448 = vld [vmem:[%s447] sm:$0xff]
  %v449 = vld [vmem:[%s447 + $0x8] sm:$0xff]
  %v450 = vld [vmem:[%s447 + $0x10] sm:$0xff]
  %v451 = vld [vmem:[%s447 + $0x18] sm:$0xff]
  %v453 = vsel %vm75, %v208, 0
  %455 = vmatprep.subr.mxu0 0.0
  %456 = vmatpush1.msra.mxu0 0.0
  %457 = vmatprep.subr.mxu0 0.0
  %458 = vmatpush1.msra.mxu0 0.0
  %459 = vmatprep.subr.mxu0 0.0
  %460 = vmatpush1.msra.mxu0 0.0
  %461 = vmatprep.subr.mxu0 0.0
  %462 = vmatpush1.msra.mxu0 0.0
  %463 = vmatprep.subr.mxu0 0.0
  %464 = vmatpush1.msra.mxu0 0.0
  %465 = vmatprep.subr.mxu0 0.0
  %466 = vmatpush1.msra.mxu0 0.0
  %467 = vmatprep.subr.mxu0 0.0
  %468 = vmatpush1.msra.mxu0 0.0
  %469 = vmatprep.subr.mxu0 0.0
  %470 = vmatpush1.msra.mxu0 0.0
  %471 = vmatprep.subr.mxu0 0.0
  %472 = vmatpush1.msra.mxu0 0.0
  %473 = vmatprep.subr.mxu0 0.0
  %474 = vmatpush1.msra.mxu0 0.0
  %475 = vmatprep.subr.mxu0 0.0
  %476 = vmatpush1.msra.mxu0 0.0
  %477 = vmatprep.subr.mxu0 0.0
  %478 = vmatpush1.msra.mxu0 0.0
  %479 = vmatprep.subr.mxu0 0.0
  %480 = vmatpush1.msra.mxu0 %v451
  %481 = vmatprep.subr.mxu0 0.0
  %482 = vmatpush1.msra.mxu0 %v450
  %483 = vmatprep.subr.mxu0 0.0
  %484 = vmatpush1.msra.mxu0 %v449
  %485 = vmatprep.subr.mxu0 0.0
  %486 = vmatpush1.msra.mxu0 %v448
  %487 = vmatprep.subr.mxu0 0.0
  %488 = vmatpush2.msra.mxu0 0.0
  %489 = vmatprep.subr.mxu0 0.0
  %490 = vmatpush2.msra.mxu0 0.0
  %491 = vmatprep.subr.mxu0 0.0
  %492 = vmatpush2.msra.mxu0 0.0
  %493 = vmatprep.subr.mxu0 0.0
  %494 = vmatpush2.msra.mxu0 0.0
  %495 = vmatprep.subr.mxu0 0.0
  %496 = vmatpush2.msra.mxu0 0.0
  %497 = vmatprep.subr.mxu0 0.0
  %498 = vmatpush2.msra.mxu0 0.0
  %499 = vmatprep.subr.mxu0 0.0
  %500 = vmatpush2.msra.mxu0 0.0
  %501 = vmatprep.subr.mxu0 0.0
  %502 = vmatpush2.msra.mxu0 0.0
  %503 = vmatprep.subr.mxu0 0.0
  %504 = vmatpush2.msra.mxu0 0.0
  %505 = vmatprep.subr.mxu0 0.0
  %506 = vmatpush2.msra.mxu0 0.0
  %507 = vmatprep.subr.mxu0 0.0
  %508 = vmatpush2.msra.mxu0 0.0
  %509 = vmatprep.subr.mxu0 0.0
  %510 = vmatpush2.msra.mxu0 0.0
  %511 = vmatprep.subr.mxu0 0.0
  %512 = vmatpush2.msra.mxu0 0.0
  %513 = vmatprep.subr.mxu0 0.0
  %514 = vmatpush2.msra.mxu0 0.0
  %515 = vmatprep.subr.mxu0 0.0
  %516 = vmatpush2.msra.mxu0 0.0
  %517 = vmatprep.subr.mxu0 0.0
  %518 = vmatpush2.msra.mxu0 0.0
  %519 = vmatprep.mubr.f32.mxu0 0.0
  %520 = vmatmul.mubr.f32.gmra.mxu0 %v453
  %v521 = vpop.f32.mrf.mxu0
  %v522 = vadd.f32 0.0, %v521
  %v523 = vpop.f32.mrf.mxu0
  %524 = vdwg.mxu0
  %v525 = vadd.f32 %v446, %v522
  %s526 = scalar_lea.vmem %s3, 128
  %v527 = vld [vmem:[%s526] sm:$0xff]
  %v528 = vld [vmem:[%s526 + $0x8] sm:$0xff]
  %v529 = vld [vmem:[%s526 + $0x10] sm:$0xff]
  %v530 = vld [vmem:[%s526 + $0x18] sm:$0xff]
  %v532 = vsel %vm75, %v209, 0
  %534 = vmatprep.subr.mxu0 0.0
  %535 = vmatpush1.msra.mxu0 0.0
  %536 = vmatprep.subr.mxu0 0.0
  %537 = vmatpush1.msra.mxu0 0.0
  %538 = vmatprep.subr.mxu0 0.0
  %539 = vmatpush1.msra.mxu0 0.0
  %540 = vmatprep.subr.mxu0 0.0
  %541 = vmatpush1.msra.mxu0 0.0
  %542 = vmatprep.subr.mxu0 0.0
  %543 = vmatpush1.msra.mxu0 0.0
  %544 = vmatprep.subr.mxu0 0.0
  %545 = vmatpush1.msra.mxu0 0.0
  %546 = vmatprep.subr.mxu0 0.0
  %547 = vmatpush1.msra.mxu0 0.0
  %548 = vmatprep.subr.mxu0 0.0
  %549 = vmatpush1.msra.mxu0 0.0
  %550 = vmatprep.subr.mxu0 0.0
  %551 = vmatpush1.msra.mxu0 0.0
  %552 = vmatprep.subr.mxu0 0.0
  %553 = vmatpush1.msra.mxu0 0.0
  %554 = vmatprep.subr.mxu0 0.0
  %555 = vmatpush1.msra.mxu0 0.0
  %556 = vmatprep.subr.mxu0 0.0
  %557 = vmatpush1.msra.mxu0 0.0
  %558 = vmatprep.subr.mxu0 0.0
  %559 = vmatpush1.msra.mxu0 %v530
  %560 = vmatprep.subr.mxu0 0.0
  %561 = vmatpush1.msra.mxu0 %v529
  %562 = vmatprep.subr.mxu0 0.0
  %563 = vmatpush1.msra.mxu0 %v528
  %564 = vmatprep.subr.mxu0 0.0
  %565 = vmatpush1.msra.mxu0 %v527
  %566 = vmatprep.subr.mxu0 0.0
  %567 = vmatpush2.msra.mxu0 0.0
  %568 = vmatprep.subr.mxu0 0.0
  %569 = vmatpush2.msra.mxu0 0.0
  %570 = vmatprep.subr.mxu0 0.0
  %571 = vmatpush2.msra.mxu0 0.0
  %572 = vmatprep.subr.mxu0 0.0
  %573 = vmatpush2.msra.mxu0 0.0
  %574 = vmatprep.subr.mxu0 0.0
  %575 = vmatpush2.msra.mxu0 0.0
  %576 = vmatprep.subr.mxu0 0.0
  %577 = vmatpush2.msra.mxu0 0.0
  %578 = vmatprep.subr.mxu0 0.0
  %579 = vmatpush2.msra.mxu0 0.0
  %580 = vmatprep.subr.mxu0 0.0
  %581 = vmatpush2.msra.mxu0 0.0
  %582 = vmatprep.subr.mxu0 0.0
  %583 = vmatpush2.msra.mxu0 0.0
  %584 = vmatprep.subr.mxu0 0.0
  %585 = vmatpush2.msra.mxu0 0.0
  %586 = vmatprep.subr.mxu0 0.0
  %587 = vmatpush2.msra.mxu0 0.0
  %588 = vmatprep.subr.mxu0 0.0
  %589 = vmatpush2.msra.mxu0 0.0
  %590 = vmatprep.subr.mxu0 0.0
  %591 = vmatpush2.msra.mxu0 0.0
  %592 = vmatprep.subr.mxu0 0.0
  %593 = vmatpush2.msra.mxu0 0.0
  %594 = vmatprep.subr.mxu0 0.0
  %595 = vmatpush2.msra.mxu0 0.0
  %596 = vmatprep.subr.mxu0 0.0
  %597 = vmatpush2.msra.mxu0 0.0
  %598 = vmatprep.mubr.f32.mxu0 0.0
  %599 = vmatmul.mubr.f32.gmra.mxu0 %v532
  %v600 = vpop.f32.mrf.mxu0
  %v601 = vadd.f32 0.0, %v600
  %v602 = vpop.f32.mrf.mxu0
  %603 = vdwg.mxu0
  %v604 = vadd.f32 %v525, %v601
  %s605 = scalar_lea.vmem %s3, 160
  %v606 = vld [vmem:[%s605] sm:$0xff]
  %v607 = vld [vmem:[%s605 + $0x8] sm:$0xff]
  %v608 = vld [vmem:[%s605 + $0x10] sm:$0xff]
  %v609 = vld [vmem:[%s605 + $0x18] sm:$0xff]
  %v611 = vsel %vm75, %v210, 0
  %613 = vmatprep.subr.mxu0 0.0
  %614 = vmatpush1.msra.mxu0 0.0
  %615 = vmatprep.subr.mxu0 0.0
  %616 = vmatpush1.msra.mxu0 0.0
  %617 = vmatprep.subr.mxu0 0.0
  %618 = vmatpush1.msra.mxu0 0.0
  %619 = vmatprep.subr.mxu0 0.0
  %620 = vmatpush1.msra.mxu0 0.0
  %621 = vmatprep.subr.mxu0 0.0
  %622 = vmatpush1.msra.mxu0 0.0
  %623 = vmatprep.subr.mxu0 0.0
  %624 = vmatpush1.msra.mxu0 0.0
  %625 = vmatprep.subr.mxu0 0.0
  %626 = vmatpush1.msra.mxu0 0.0
  %627 = vmatprep.subr.mxu0 0.0
  %628 = vmatpush1.msra.mxu0 0.0
  %629 = vmatprep.subr.mxu0 0.0
  %630 = vmatpush1.msra.mxu0 0.0
  %631 = vmatprep.subr.mxu0 0.0
  %632 = vmatpush1.msra.mxu0 0.0
  %633 = vmatprep.subr.mxu0 0.0
  %634 = vmatpush1.msra.mxu0 0.0
  %635 = vmatprep.subr.mxu0 0.0
  %636 = vmatpush1.msra.mxu0 0.0
  %637 = vmatprep.subr.mxu0 0.0
  %638 = vmatpush1.msra.mxu0 %v609
  %639 = vmatprep.subr.mxu0 0.0
  %640 = vmatpush1.msra.mxu0 %v608
  %641 = vmatprep.subr.mxu0 0.0
  %642 = vmatpush1.msra.mxu0 %v607
  %643 = vmatprep.subr.mxu0 0.0
  %644 = vmatpush1.msra.mxu0 %v606
  %645 = vmatprep.subr.mxu0 0.0
  %646 = vmatpush2.msra.mxu0 0.0
  %647 = vmatprep.subr.mxu0 0.0
  %648 = vmatpush2.msra.mxu0 0.0
  %649 = vmatprep.subr.mxu0 0.0
  %650 = vmatpush2.msra.mxu0 0.0
  %651 = vmatprep.subr.mxu0 0.0
  %652 = vmatpush2.msra.mxu0 0.0
  %653 = vmatprep.subr.mxu0 0.0
  %654 = vmatpush2.msra.mxu0 0.0
  %655 = vmatprep.subr.mxu0 0.0
  %656 = vmatpush2.msra.mxu0 0.0
  %657 = vmatprep.subr.mxu0 0.0
  %658 = vmatpush2.msra.mxu0 0.0
  %659 = vmatprep.subr.mxu0 0.0
  %660 = vmatpush2.msra.mxu0 0.0
  %661 = vmatprep.subr.mxu0 0.0
  %662 = vmatpush2.msra.mxu0 0.0
  %663 = vmatprep.subr.mxu0 0.0
  %664 = vmatpush2.msra.mxu0 0.0
  %665 = vmatprep.subr.mxu0 0.0
  %666 = vmatpush2.msra.mxu0 0.0
  %667 = vmatprep.subr.mxu0 0.0
  %668 = vmatpush2.msra.mxu0 0.0
  %669 = vmatprep.subr.mxu0 0.0
  %670 = vmatpush2.msra.mxu0 0.0
  %671 = vmatprep.subr.mxu0 0.0
  %672 = vmatpush2.msra.mxu0 0.0
  %673 = vmatprep.subr.mxu0 0.0
  %674 = vmatpush2.msra.mxu0 0.0
  %675 = vmatprep.subr.mxu0 0.0
  %676 = vmatpush2.msra.mxu0 0.0
  %677 = vmatprep.mubr.f32.mxu0 0.0
  %678 = vmatmul.mubr.f32.gmra.mxu0 %v611
  %v679 = vpop.f32.mrf.mxu0
  %v680 = vadd.f32 0.0, %v679
  %v681 = vpop.f32.mrf.mxu0
  %682 = vdwg.mxu0
  %v683 = vadd.f32 %v604, %v680
  %s684 = scalar_lea.vmem %s3, 192
  %v685 = vld [vmem:[%s684] sm:$0xff]
  %v686 = vld [vmem:[%s684 + $0x8] sm:$0xff]
  %v687 = vld [vmem:[%s684 + $0x10] sm:$0xff]
  %v688 = vld [vmem:[%s684 + $0x18] sm:$0xff]
  %v690 = vsel %vm75, %v211, 0
  %692 = vmatprep.subr.mxu0 0.0
  %693 = vmatpush1.msra.mxu0 0.0
  %694 = vmatprep.subr.mxu0 0.0
  %695 = vmatpush1.msra.mxu0 0.0
  %696 = vmatprep.subr.mxu0 0.0
  %697 = vmatpush1.msra.mxu0 0.0
  %698 = vmatprep.subr.mxu0 0.0
  %699 = vmatpush1.msra.mxu0 0.0
  %700 = vmatprep.subr.mxu0 0.0
  %701 = vmatpush1.msra.mxu0 0.0
  %702 = vmatprep.subr.mxu0 0.0
  %703 = vmatpush1.msra.mxu0 0.0
  %704 = vmatprep.subr.mxu0 0.0
  %705 = vmatpush1.msra.mxu0 0.0
  %706 = vmatprep.subr.mxu0 0.0
  %707 = vmatpush1.msra.mxu0 0.0
  %708 = vmatprep.subr.mxu0 0.0
  %709 = vmatpush1.msra.mxu0 0.0
  %710 = vmatprep.subr.mxu0 0.0
  %711 = vmatpush1.msra.mxu0 0.0
  %712 = vmatprep.subr.mxu0 0.0
  %713 = vmatpush1.msra.mxu0 0.0
  %714 = vmatprep.subr.mxu0 0.0
  %715 = vmatpush1.msra.mxu0 0.0
  %716 = vmatprep.subr.mxu0 0.0
  %717 = vmatpush1.msra.mxu0 %v688
  %718 = vmatprep.subr.mxu0 0.0
  %719 = vmatpush1.msra.mxu0 %v687
  %720 = vmatprep.subr.mxu0 0.0
  %721 = vmatpush1.msra.mxu0 %v686
  %722 = vmatprep.subr.mxu0 0.0
  %723 = vmatpush1.msra.mxu0 %v685
  %724 = vmatprep.subr.mxu0 0.0
  %725 = vmatpush2.msra.mxu0 0.0
  %726 = vmatprep.subr.mxu0 0.0
  %727 = vmatpush2.msra.mxu0 0.0
  %728 = vmatprep.subr.mxu0 0.0
  %729 = vmatpush2.msra.mxu0 0.0
  %730 = vmatprep.subr.mxu0 0.0
  %731 = vmatpush2.msra.mxu0 0.0
  %732 = vmatprep.subr.mxu0 0.0
  %733 = vmatpush2.msra.mxu0 0.0
  %734 = vmatprep.subr.mxu0 0.0
  %735 = vmatpush2.msra.mxu0 0.0
  %736 = vmatprep.subr.mxu0 0.0
  %737 = vmatpush2.msra.mxu0 0.0
  %738 = vmatprep.subr.mxu0 0.0
  %739 = vmatpush2.msra.mxu0 0.0
  %740 = vmatprep.subr.mxu0 0.0
  %741 = vmatpush2.msra.mxu0 0.0
  %742 = vmatprep.subr.mxu0 0.0
  %743 = vmatpush2.msra.mxu0 0.0
  %744 = vmatprep.subr.mxu0 0.0
  %745 = vmatpush2.msra.mxu0 0.0
  %746 = vmatprep.subr.mxu0 0.0
  %747 = vmatpush2.msra.mxu0 0.0
  %748 = vmatprep.subr.mxu0 0.0
  %749 = vmatpush2.msra.mxu0 0.0
  %750 = vmatprep.subr.mxu0 0.0
  %751 = vmatpush2.msra.mxu0 0.0
  %752 = vmatprep.subr.mxu0 0.0
  %753 = vmatpush2.msra.mxu0 0.0
  %754 = vmatprep.subr.mxu0 0.0
  %755 = vmatpush2.msra.mxu0 0.0
  %756 = vmatprep.mubr.f32.mxu0 0.0
  %757 = vmatmul.mubr.f32.gmra.mxu0 %v690
  %v758 = vpop.f32.mrf.mxu0
  %v759 = vadd.f32 0.0, %v758
  %v760 = vpop.f32.mrf.mxu0
  %761 = vdwg.mxu0
  %v762 = vadd.f32 %v683, %v759
  %s763 = scalar_lea.vmem %s3, 224
  %v764 = vld [vmem:[%s763] sm:$0xff]
  %v765 = vld [vmem:[%s763 + $0x8] sm:$0xff]
  %v766 = vld [vmem:[%s763 + $0x10] sm:$0xff]
  %v767 = vld [vmem:[%s763 + $0x18] sm:$0xff]
  %v769 = vsel %vm75, %v212, 0
  %771 = vmatprep.subr.mxu0 0.0
  %772 = vmatpush1.msra.mxu0 0.0
  %773 = vmatprep.subr.mxu0 0.0
  %774 = vmatpush1.msra.mxu0 0.0
  %775 = vmatprep.subr.mxu0 0.0
  %776 = vmatpush1.msra.mxu0 0.0
  %777 = vmatprep.subr.mxu0 0.0
  %778 = vmatpush1.msra.mxu0 0.0
  %779 = vmatprep.subr.mxu0 0.0
  %780 = vmatpush1.msra.mxu0 0.0
  %781 = vmatprep.subr.mxu0 0.0
  %782 = vmatpush1.msra.mxu0 0.0
  %783 = vmatprep.subr.mxu0 0.0
  %784 = vmatpush1.msra.mxu0 0.0
  %785 = vmatprep.subr.mxu0 0.0
  %786 = vmatpush1.msra.mxu0 0.0
  %787 = vmatprep.subr.mxu0 0.0
  %788 = vmatpush1.msra.mxu0 0.0
  %789 = vmatprep.subr.mxu0 0.0
  %790 = vmatpush1.msra.mxu0 0.0
  %791 = vmatprep.subr.mxu0 0.0
  %792 = vmatpush1.msra.mxu0 0.0
  %793 = vmatprep.subr.mxu0 0.0
  %794 = vmatpush1.msra.mxu0 0.0
  %795 = vmatprep.subr.mxu0 0.0
  %796 = vmatpush1.msra.mxu0 %v767
  %797 = vmatprep.subr.mxu0 0.0
  %798 = vmatpush1.msra.mxu0 %v766
  %799 = vmatprep.subr.mxu0 0.0
  %800 = vmatpush1.msra.mxu0 %v765
  %801 = vmatprep.subr.mxu0 0.0
  %802 = vmatpush1.msra.mxu0 %v764
  %803 = vmatprep.subr.mxu0 0.0
  %804 = vmatpush2.msra.mxu0 0.0
  %805 = vmatprep.subr.mxu0 0.0
  %806 = vmatpush2.msra.mxu0 0.0
  %807 = vmatprep.subr.mxu0 0.0
  %808 = vmatpush2.msra.mxu0 0.0
  %809 = vmatprep.subr.mxu0 0.0
  %810 = vmatpush2.msra.mxu0 0.0
  %811 = vmatprep.subr.mxu0 0.0
  %812 = vmatpush2.msra.mxu0 0.0
  %813 = vmatprep.subr.mxu0 0.0
  %814 = vmatpush2.msra.mxu0 0.0
  %815 = vmatprep.subr.mxu0 0.0
  %816 = vmatpush2.msra.mxu0 0.0
  %817 = vmatprep.subr.mxu0 0.0
  %818 = vmatpush2.msra.mxu0 0.0
  %819 = vmatprep.subr.mxu0 0.0
  %820 = vmatpush2.msra.mxu0 0.0
  %821 = vmatprep.subr.mxu0 0.0
  %822 = vmatpush2.msra.mxu0 0.0
  %823 = vmatprep.subr.mxu0 0.0
  %824 = vmatpush2.msra.mxu0 0.0
  %825 = vmatprep.subr.mxu0 0.0
  %826 = vmatpush2.msra.mxu0 0.0
  %827 = vmatprep.subr.mxu0 0.0
  %828 = vmatpush2.msra.mxu0 0.0
  %829 = vmatprep.subr.mxu0 0.0
  %830 = vmatpush2.msra.mxu0 0.0
  %831 = vmatprep.subr.mxu0 0.0
  %832 = vmatpush2.msra.mxu0 0.0
  %833 = vmatprep.subr.mxu0 0.0
  %834 = vmatpush2.msra.mxu0 0.0
  %835 = vmatprep.mubr.f32.mxu0 0.0
  %836 = vmatmul.mubr.f32.gmra.mxu0 %v769
  %v837 = vpop.f32.mrf.mxu0
  %v838 = vadd.f32 0.0, %v837
  %v839 = vpop.f32.mrf.mxu0
  %840 = vdwg.mxu0
  %v841 = vadd.f32 %v762, %v838
  %v842 = vld [vmem:[%s4] sm:$0x1]
  %v844 = vlaneseq
  %v845 = vshrl.u32 %v844, 7
  %v846 = vsub.s32 0, %v845
  %v847 = vrot.slane %v842, %v846
  %v849 = vadd.f32 %v841, %v847
  %v850 = vmax.f32 %v849, 0.0
  %v851 = vld [vmem:[%s5] sm:$0xff]
  %v852 = vld [vmem:[%s5 + $0x8] sm:$0xff]
  %v853 = vld [vmem:[%s5 + $0x10] sm:$0xff]
  %v854 = vld [vmem:[%s5 + $0x18] sm:$0xff]
  %v855 = vld [vmem:[%s5 + $0x20] sm:$0xff]
  %v856 = vld [vmem:[%s5 + $0x28] sm:$0xff]
  %v857 = vld [vmem:[%s5 + $0x30] sm:$0xff]
  %v858 = vld [vmem:[%s5 + $0x38] sm:$0xff]
  %v859 = vld [vmem:[%s6] sm:$0x1]
  %v861 = vlaneseq
  %v862 = vshrl.u32 %v861, 7
  %v863 = vsub.s32 0, %v862
  %v864 = vrot.slane %v859, %v863
  %vm866 = vcmask 523264
  %v868 = vsel %vm866, %v850, 0
  %870 = vmatprep.subr.mxu0 0.0
  %871 = vmatpush1.msra.mxu0 0.0
  %872 = vmatprep.subr.mxu0 0.0
  %873 = vmatpush1.msra.mxu0 0.0
  %874 = vmatprep.subr.mxu0 0.0
  %875 = vmatpush1.msra.mxu0 0.0
  %876 = vmatprep.subr.mxu0 0.0
  %877 = vmatpush1.msra.mxu0 0.0
  %878 = vmatprep.subr.mxu0 0.0
  %879 = vmatpush1.msra.mxu0 0.0
  %880 = vmatprep.subr.mxu0 0.0
  %881 = vmatpush1.msra.mxu0 0.0
  %882 = vmatprep.subr.mxu0 0.0
  %883 = vmatpush1.msra.mxu0 0.0
  %884 = vmatprep.subr.mxu0 0.0
  %885 = vmatpush1.msra.mxu0 0.0
  %886 = vmatprep.subr.mxu0 0.0
  %887 = vmatpush1.msra.mxu0 %v858
  %888 = vmatprep.subr.mxu0 0.0
  %889 = vmatpush1.msra.mxu0 %v857
  %890 = vmatprep.subr.mxu0 0.0
  %891 = vmatpush1.msra.mxu0 %v856
  %892 = vmatprep.subr.mxu0 0.0
  %893 = vmatpush1.msra.mxu0 %v855
  %894 = vmatprep.subr.mxu0 0.0
  %895 = vmatpush1.msra.mxu0 %v854
  %896 = vmatprep.subr.mxu0 0.0
  %897 = vmatpush1.msra.mxu0 %v853
  %898 = vmatprep.subr.mxu0 0.0
  %899 = vmatpush1.msra.mxu0 %v852
  %900 = vmatprep.subr.mxu0 0.0
  %901 = vmatpush1.msra.mxu0 %v851
  %902 = vmatprep.subr.mxu0 0.0
  %903 = vmatpush2.msra.mxu0 0.0
  %904 = vmatprep.subr.mxu0 0.0
  %905 = vmatpush2.msra.mxu0 0.0
  %906 = vmatprep.subr.mxu0 0.0
  %907 = vmatpush2.msra.mxu0 0.0
  %908 = vmatprep.subr.mxu0 0.0
  %909 = vmatpush2.msra.mxu0 0.0
  %910 = vmatprep.subr.mxu0 0.0
  %911 = vmatpush2.msra.mxu0 0.0
  %912 = vmatprep.subr.mxu0 0.0
  %913 = vmatpush2.msra.mxu0 0.0
  %914 = vmatprep.subr.mxu0 0.0
  %915 = vmatpush2.msra.mxu0 0.0
  %916 = vmatprep.subr.mxu0 0.0
  %917 = vmatpush2.msra.mxu0 0.0
  %918 = vmatprep.subr.mxu0 0.0
  %919 = vmatpush2.msra.mxu0 0.0
  %920 = vmatprep.subr.mxu0 0.0
  %921 = vmatpush2.msra.mxu0 0.0
  %922 = vmatprep.subr.mxu0 0.0
  %923 = vmatpush2.msra.mxu0 0.0
  %924 = vmatprep.subr.mxu0 0.0
  %925 = vmatpush2.msra.mxu0 0.0
  %926 = vmatprep.subr.mxu0 0.0
  %927 = vmatpush2.msra.mxu0 0.0
  %928 = vmatprep.subr.mxu0 0.0
  %929 = vmatpush2.msra.mxu0 0.0
  %930 = vmatprep.subr.mxu0 0.0
  %931 = vmatpush2.msra.mxu0 0.0
  %932 = vmatprep.subr.mxu0 0.0
  %933 = vmatpush2.msra.mxu0 0.0
  %934 = vmatprep.mubr.f32.mxu0 0.0
  %935 = vmatmul.mubr.f32.gmra.mxu0 %v868
  %v936 = vpop.f32.mrf.mxu0
  %v937 = vadd.f32 %v864, %v936
  %v938 = vpop.f32.mrf.mxu0
  %939 = vdwg.mxu0
  %v940 = vld [vmem:[%s7] sm:$0xff]
  %v941 = vld [vmem:[%s7 + $0x8] sm:$0xff]
  %v942 = vld [vmem:[%s7 + $0x10] sm:$0xff]
  %v943 = vld [vmem:[%s7 + $0x18] sm:$0xff]
  %v944 = vld [vmem:[%s7 + $0x20] sm:$0xff]
  %v945 = vld [vmem:[%s7 + $0x28] sm:$0xff]
  %v946 = vld [vmem:[%s7 + $0x30] sm:$0xff]
  %v947 = vld [vmem:[%s7 + $0x38] sm:$0xff]
  %v948 = vld [vmem:[%s8] sm:$0x1]
  %v950 = vlaneseq
  %v951 = vshrl.u32 %v950, 7
  %v952 = vsub.s32 0, %v951
  %v953 = vrot.slane %v948, %v952
  %955 = vmatprep.subr.mxu0 0.0
  %956 = vmatpush1.msra.mxu0 0.0
  %957 = vmatprep.subr.mxu0 0.0
  %958 = vmatpush1.msra.mxu0 0.0
  %959 = vmatprep.subr.mxu0 0.0
  %960 = vmatpush1.msra.mxu0 0.0
  %961 = vmatprep.subr.mxu0 0.0
  %962 = vmatpush1.msra.mxu0 0.0
  %963 = vmatprep.subr.mxu0 0.0
  %964 = vmatpush1.msra.mxu0 0.0
  %965 = vmatprep.subr.mxu0 0.0
  %966 = vmatpush1.msra.mxu0 0.0
  %967 = vmatprep.subr.mxu0 0.0
  %968 = vmatpush1.msra.mxu0 0.0
  %969 = vmatprep.subr.mxu0 0.0
  %970 = vmatpush1.msra.mxu0 0.0
  %971 = vmatprep.subr.mxu0 0.0
  %972 = vmatpush1.msra.mxu0 %v947
  %973 = vmatprep.subr.mxu0 0.0
  %974 = vmatpush1.msra.mxu0 %v946
  %975 = vmatprep.subr.mxu0 0.0
  %976 = vmatpush1.msra.mxu0 %v945
  %977 = vmatprep.subr.mxu0 0.0
  %978 = vmatpush1.msra.mxu0 %v944
  %979 = vmatprep.subr.mxu0 0.0
  %980 = vmatpush1.msra.mxu0 %v943
  %981 = vmatprep.subr.mxu0 0.0
  %982 = vmatpush1.msra.mxu0 %v942
  %983 = vmatprep.subr.mxu0 0.0
  %984 = vmatpush1.msra.mxu0 %v941
  %985 = vmatprep.subr.mxu0 0.0
  %986 = vmatpush1.msra.mxu0 %v940
  %987 = vmatprep.subr.mxu0 0.0
  %988 = vmatpush2.msra.mxu0 0.0
  %989 = vmatprep.subr.mxu0 0.0
  %990 = vmatpush2.msra.mxu0 0.0
  %991 = vmatprep.subr.mxu0 0.0
  %992 = vmatpush2.msra.mxu0 0.0
  %993 = vmatprep.subr.mxu0 0.0
  %994 = vmatpush2.msra.mxu0 0.0
  %995 = vmatprep.subr.mxu0 0.0
  %996 = vmatpush2.msra.mxu0 0.0
  %997 = vmatprep.subr.mxu0 0.0
  %998 = vmatpush2.msra.mxu0 0.0
  %999 = vmatprep.subr.mxu0 0.0
  %1000 = vmatpush2.msra.mxu0 0.0
  %1001 = vmatprep.subr.mxu0 0.0
  %1002 = vmatpush2.msra.mxu0 0.0
  %1003 = vmatprep.subr.mxu0 0.0
  %1004 = vmatpush2.msra.mxu0 0.0
  %1005 = vmatprep.subr.mxu0 0.0
  %1006 = vmatpush2.msra.mxu0 0.0
  %1007 = vmatprep.subr.mxu0 0.0
  %1008 = vmatpush2.msra.mxu0 0.0
  %1009 = vmatprep.subr.mxu0 0.0
  %1010 = vmatpush2.msra.mxu0 0.0
  %1011 = vmatprep.subr.mxu0 0.0
  %1012 = vmatpush2.msra.mxu0 0.0
  %1013 = vmatprep.subr.mxu0 0.0
  %1014 = vmatpush2.msra.mxu0 0.0
  %1015 = vmatprep.subr.mxu0 0.0
  %1016 = vmatpush2.msra.mxu0 0.0
  %1017 = vmatprep.subr.mxu0 0.0
  %1018 = vmatpush2.msra.mxu0 0.0
  %1019 = vmatprep.mubr.f32.mxu0 0.0
  %1020 = vmatmul.mubr.f32.gmra.mxu0 %v868
  %v1021 = vpop.f32.mrf.mxu0
  %v1022 = vadd.f32 %v953, %v1021
  %v1023 = vpop.f32.mrf.mxu0
  %1024 = vdwg.mxu0
  %vm1025 = vcmask 154624
  %1026 = vst.msk [vmem:[%s17] sm:$0xff] %vm1025, %v937
  %1027 = vst.msk [vmem:[%s18] sm:$0xff] %vm1025, %v1022
  %v1028 = vld [vmem:[%s15] sm:$0xff]
  %v1029 = vmul.f32 %v1022, 0.5
  %v1030 = vmul.f32 %v1029, 1.442695
  %v1031 = vpow.pop %v1030
  %v1032 = vmul.f32 %v1028, %v1031
  %v1033 = vadd.f32 %v937, %v1032
  %v1034 = vld [vmem:[%s9] sm:$0xff]
  %v1035 = vld [vmem:[%s9 + $0x8] sm:$0xff]
  %v1036 = vld [vmem:[%s9 + $0x10] sm:$0x7]
  %v1037 = vld [vmem:[%s10] sm:$0x1]
  %v1039 = vlaneseq
  %v1040 = vshrl.u32 %v1039, 7
  %v1041 = vsub.s32 0, %v1040
  %v1042 = vrot.slane %v1037, %v1041
  %v1045 = vsel %vm1025, %v1033, 0
  %vm1047 = vcmask 1042432
  %v1049 = vsel %vm1047, %v1036, 0
  %1051 = vmatprep.subr.mxu0 0.0
  %1052 = vmatpush1.msra.mxu0 0.0
  %1053 = vmatprep.subr.mxu0 0.0
  %1054 = vmatpush1.msra.mxu0 0.0
  %1055 = vmatprep.subr.mxu0 0.0
  %1056 = vmatpush1.msra.mxu0 0.0
  %1057 = vmatprep.subr.mxu0 0.0
  %1058 = vmatpush1.msra.mxu0 0.0
  %1059 = vmatprep.subr.mxu0 0.0
  %1060 = vmatpush1.msra.mxu0 0.0
  %1061 = vmatprep.subr.mxu0 0.0
  %1062 = vmatpush1.msra.mxu0 0.0
  %1063 = vmatprep.subr.mxu0 0.0
  %1064 = vmatpush1.msra.mxu0 0.0
  %1065 = vmatprep.subr.mxu0 0.0
  %1066 = vmatpush1.msra.mxu0 0.0
  %1067 = vmatprep.subr.mxu0 0.0
  %1068 = vmatpush1.msra.mxu0 0.0
  %1069 = vmatprep.subr.mxu0 0.0
  %1070 = vmatpush1.msra.mxu0 0.0
  %1071 = vmatprep.subr.mxu0 0.0
  %1072 = vmatpush1.msra.mxu0 0.0
  %1073 = vmatprep.subr.mxu0 0.0
  %1074 = vmatpush1.msra.mxu0 0.0
  %1075 = vmatprep.subr.mxu0 0.0
  %1076 = vmatpush1.msra.mxu0 0.0
  %1077 = vmatprep.subr.mxu0 0.0
  %1078 = vmatpush1.msra.mxu0 %v1049
  %1079 = vmatprep.subr.mxu0 0.0
  %1080 = vmatpush1.msra.mxu0 %v1035
  %1081 = vmatprep.subr.mxu0 0.0
  %1082 = vmatpush1.msra.mxu0 %v1034
  %1083 = vmatprep.subr.mxu0 0.0
  %1084 = vmatpush2.msra.mxu0 0.0
  %1085 = vmatprep.subr.mxu0 0.0
  %1086 = vmatpush2.msra.mxu0 0.0
  %1087 = vmatprep.subr.mxu0 0.0
  %1088 = vmatpush2.msra.mxu0 0.0
  %1089 = vmatprep.subr.mxu0 0.0
  %1090 = vmatpush2.msra.mxu0 0.0
  %1091 = vmatprep.subr.mxu0 0.0
  %1092 = vmatpush2.msra.mxu0 0.0
  %1093 = vmatprep.subr.mxu0 0.0
  %1094 = vmatpush2.msra.mxu0 0.0
  %1095 = vmatprep.subr.mxu0 0.0
  %1096 = vmatpush2.msra.mxu0 0.0
  %1097 = vmatprep.subr.mxu0 0.0
  %1098 = vmatpush2.msra.mxu0 0.0
  %1099 = vmatprep.subr.mxu0 0.0
  %1100 = vmatpush2.msra.mxu0 0.0
  %1101 = vmatprep.subr.mxu0 0.0
  %1102 = vmatpush2.msra.mxu0 0.0
  %1103 = vmatprep.subr.mxu0 0.0
  %1104 = vmatpush2.msra.mxu0 0.0
  %1105 = vmatprep.subr.mxu0 0.0
  %1106 = vmatpush2.msra.mxu0 0.0
  %1107 = vmatprep.subr.mxu0 0.0
  %1108 = vmatpush2.msra.mxu0 0.0
  %1109 = vmatprep.subr.mxu0 0.0
  %1110 = vmatpush2.msra.mxu0 0.0
  %1111 = vmatprep.subr.mxu0 0.0
  %1112 = vmatpush2.msra.mxu0 0.0
  %1113 = vmatprep.subr.mxu0 0.0
  %1114 = vmatpush2.msra.mxu0 0.0
  %1115 = vmatprep.mubr.f32.mxu0 0.0
  %1116 = vmatmul.mubr.f32.gmra.mxu0 %v1045
  %v1117 = vpop.f32.mrf.mxu0
  %v1118 = vadd.f32 %v1042, %v1117
  %v1119 = vpop.f32.mrf.mxu0
  %1120 = vdwg.mxu0
  %v1121 = vmax.f32 %v1118, 0.0
  %v1122 = vld [vmem:[%s11] sm:$0xff]
  %v1123 = vld [vmem:[%s11 + $0x8] sm:$0xff]
  %v1124 = vld [vmem:[%s11 + $0x10] sm:$0xff]
  %v1125 = vld [vmem:[%s11 + $0x18] sm:$0xff]
  %v1126 = vld [vmem:[%s11 + $0x20] sm:$0xff]
  %v1127 = vld [vmem:[%s11 + $0x28] sm:$0xff]
  %v1128 = vld [vmem:[%s11 + $0x30] sm:$0xff]
  %v1129 = vld [vmem:[%s11 + $0x38] sm:$0xff]
  %v1130 = vld [vmem:[%s12] sm:$0x1]
  %v1132 = vlaneseq
  %v1133 = vshrl.u32 %v1132, 7
  %v1134 = vsub.s32 0, %v1133
  %v1135 = vrot.slane %v1130, %v1134
  %v1138 = vsel %vm866, %v1121, 0
  %1140 = vmatprep.subr.mxu0 0.0
  %1141 = vmatpush1.msra.mxu0 0.0
  %1142 = vmatprep.subr.mxu0 0.0
  %1143 = vmatpush1.msra.mxu0 0.0
  %1144 = vmatprep.subr.mxu0 0.0
  %1145 = vmatpush1.msra.mxu0 0.0
  %1146 = vmatprep.subr.mxu0 0.0
  %1147 = vmatpush1.msra.mxu0 0.0
  %1148 = vmatprep.subr.mxu0 0.0
  %1149 = vmatpush1.msra.mxu0 0.0
  %1150 = vmatprep.subr.mxu0 0.0
  %1151 = vmatpush1.msra.mxu0 0.0
  %1152 = vmatprep.subr.mxu0 0.0
  %1153 = vmatpush1.msra.mxu0 0.0
  %1154 = vmatprep.subr.mxu0 0.0
  %1155 = vmatpush1.msra.mxu0 0.0
  %1156 = vmatprep.subr.mxu0 0.0
  %1157 = vmatpush1.msra.mxu0 %v1129
  %1158 = vmatprep.subr.mxu0 0.0
  %1159 = vmatpush1.msra.mxu0 %v1128
  %1160 = vmatprep.subr.mxu0 0.0
  %1161 = vmatpush1.msra.mxu0 %v1127
  %1162 = vmatprep.subr.mxu0 0.0
  %1163 = vmatpush1.msra.mxu0 %v1126
  %1164 = vmatprep.subr.mxu0 0.0
  %1165 = vmatpush1.msra.mxu0 %v1125
  %1166 = vmatprep.subr.mxu0 0.0
  %1167 = vmatpush1.msra.mxu0 %v1124
  %1168 = vmatprep.subr.mxu0 0.0
  %1169 = vmatpush1.msra.mxu0 %v1123
  %1170 = vmatprep.subr.mxu0 0.0
  %1171 = vmatpush1.msra.mxu0 %v1122
  %1172 = vmatprep.subr.mxu0 0.0
  %1173 = vmatpush2.msra.mxu0 0.0
  %1174 = vmatprep.subr.mxu0 0.0
  %1175 = vmatpush2.msra.mxu0 0.0
  %1176 = vmatprep.subr.mxu0 0.0
  %1177 = vmatpush2.msra.mxu0 0.0
  %1178 = vmatprep.subr.mxu0 0.0
  %1179 = vmatpush2.msra.mxu0 0.0
  %1180 = vmatprep.subr.mxu0 0.0
  %1181 = vmatpush2.msra.mxu0 0.0
  %1182 = vmatprep.subr.mxu0 0.0
  %1183 = vmatpush2.msra.mxu0 0.0
  %1184 = vmatprep.subr.mxu0 0.0
  %1185 = vmatpush2.msra.mxu0 0.0
  %1186 = vmatprep.subr.mxu0 0.0
  %1187 = vmatpush2.msra.mxu0 0.0
  %1188 = vmatprep.subr.mxu0 0.0
  %1189 = vmatpush2.msra.mxu0 0.0
  %1190 = vmatprep.subr.mxu0 0.0
  %1191 = vmatpush2.msra.mxu0 0.0
  %1192 = vmatprep.subr.mxu0 0.0
  %1193 = vmatpush2.msra.mxu0 0.0
  %1194 = vmatprep.subr.mxu0 0.0
  %1195 = vmatpush2.msra.mxu0 0.0
  %1196 = vmatprep.subr.mxu0 0.0
  %1197 = vmatpush2.msra.mxu0 0.0
  %1198 = vmatprep.subr.mxu0 0.0
  %1199 = vmatpush2.msra.mxu0 0.0
  %1200 = vmatprep.subr.mxu0 0.0
  %1201 = vmatpush2.msra.mxu0 0.0
  %1202 = vmatprep.subr.mxu0 0.0
  %1203 = vmatpush2.msra.mxu0 0.0
  %1204 = vmatprep.mubr.f32.mxu0 0.0
  %1205 = vmatmul.mubr.f32.gmra.mxu0 %v1138
  %v1206 = vpop.f32.mrf.mxu0
  %v1207 = vadd.f32 %v1135, %v1206
  %v1208 = vpop.f32.mrf.mxu0
  %1209 = vdwg.mxu0
  %v1210 = vmax.f32 %v1207, 0.0
  %1211 = vst.msk [vmem:[#allocation2] sm:$0xff] %vm75, %v1210
  %s1212 = scalar_lea.vmem %s11, 64
  %v1213 = vld [vmem:[%s1212] sm:$0xff]
  %v1214 = vld [vmem:[%s1212 + $0x8] sm:$0xff]
  %v1215 = vld [vmem:[%s1212 + $0x10] sm:$0xff]
  %v1216 = vld [vmem:[%s1212 + $0x18] sm:$0xff]
  %v1217 = vld [vmem:[%s1212 + $0x20] sm:$0xff]
  %v1218 = vld [vmem:[%s1212 + $0x28] sm:$0xff]
  %v1219 = vld [vmem:[%s1212 + $0x30] sm:$0xff]
  %v1220 = vld [vmem:[%s1212 + $0x38] sm:$0xff]
  %s1221 = scalar_lea.vmem %s12, 1
  %v1222 = vld [vmem:[%s1221] sm:$0x1]
  %v1224 = vlaneseq
  %v1225 = vshrl.u32 %v1224, 7
  %v1226 = vsub.s32 0, %v1225
  %v1227 = vrot.slane %v1222, %v1226
  %1229 = vmatprep.subr.mxu0 0.0
  %1230 = vmatpush1.msra.mxu0 0.0
  %1231 = vmatprep.subr.mxu0 0.0
  %1232 = vmatpush1.msra.mxu0 0.0
  %1233 = vmatprep.subr.mxu0 0.0
  %1234 = vmatpush1.msra.mxu0 0.0
  %1235 = vmatprep.subr.mxu0 0.0
  %1236 = vmatpush1.msra.mxu0 0.0
  %1237 = vmatprep.subr.mxu0 0.0
  %1238 = vmatpush1.msra.mxu0 0.0
  %1239 = vmatprep.subr.mxu0 0.0
  %1240 = vmatpush1.msra.mxu0 0.0
  %1241 = vmatprep.subr.mxu0 0.0
  %1242 = vmatpush1.msra.mxu0 0.0
  %1243 = vmatprep.subr.mxu0 0.0
  %1244 = vmatpush1.msra.mxu0 0.0
  %1245 = vmatprep.subr.mxu0 0.0
  %1246 = vmatpush1.msra.mxu0 %v1220
  %1247 = vmatprep.subr.mxu0 0.0
  %1248 = vmatpush1.msra.mxu0 %v1219
  %1249 = vmatprep.subr.mxu0 0.0
  %1250 = vmatpush1.msra.mxu0 %v1218
  %1251 = vmatprep.subr.mxu0 0.0
  %1252 = vmatpush1.msra.mxu0 %v1217
  %1253 = vmatprep.subr.mxu0 0.0
  %1254 = vmatpush1.msra.mxu0 %v1216
  %1255 = vmatprep.subr.mxu0 0.0
  %1256 = vmatpush1.msra.mxu0 %v1215
  %1257 = vmatprep.subr.mxu0 0.0
  %1258 = vmatpush1.msra.mxu0 %v1214
  %1259 = vmatprep.subr.mxu0 0.0
  %1260 = vmatpush1.msra.mxu0 %v1213
  %1261 = vmatprep.subr.mxu0 0.0
  %1262 = vmatpush2.msra.mxu0 0.0
  %1263 = vmatprep.subr.mxu0 0.0
  %1264 = vmatpush2.msra.mxu0 0.0
  %1265 = vmatprep.subr.mxu0 0.0
  %1266 = vmatpush2.msra.mxu0 0.0
  %1267 = vmatprep.subr.mxu0 0.0
  %1268 = vmatpush2.msra.mxu0 0.0
  %1269 = vmatprep.subr.mxu0 0.0
  %1270 = vmatpush2.msra.mxu0 0.0
  %1271 = vmatprep.subr.mxu0 0.0
  %1272 = vmatpush2.msra.mxu0 0.0
  %1273 = vmatprep.subr.mxu0 0.0
  %1274 = vmatpush2.msra.mxu0 0.0
  %1275 = vmatprep.subr.mxu0 0.0
  %1276 = vmatpush2.msra.mxu0 0.0
  %1277 = vmatprep.subr.mxu0 0.0
  %1278 = vmatpush2.msra.mxu0 0.0
  %1279 = vmatprep.subr.mxu0 0.0
  %1280 = vmatpush2.msra.mxu0 0.0
  %1281 = vmatprep.subr.mxu0 0.0
  %1282 = vmatpush2.msra.mxu0 0.0
  %1283 = vmatprep.subr.mxu0 0.0
  %1284 = vmatpush2.msra.mxu0 0.0
  %1285 = vmatprep.subr.mxu0 0.0
  %1286 = vmatpush2.msra.mxu0 0.0
  %1287 = vmatprep.subr.mxu0 0.0
  %1288 = vmatpush2.msra.mxu0 0.0
  %1289 = vmatprep.subr.mxu0 0.0
  %1290 = vmatpush2.msra.mxu0 0.0
  %1291 = vmatprep.subr.mxu0 0.0
  %1292 = vmatpush2.msra.mxu0 0.0
  %1293 = vmatprep.mubr.f32.mxu0 0.0
  %1294 = vmatmul.mubr.f32.gmra.mxu0 %v1138
  %v1295 = vpop.f32.mrf.mxu0
  %v1296 = vadd.f32 %v1227, %v1295
  %v1297 = vpop.f32.mrf.mxu0
  %1298 = vdwg.mxu0
  %v1299 = vmax.f32 %v1296, 0.0
  %1300 = vst.msk [vmem:[#allocation2 + $0x8] sm:$0xff] %vm75, %v1299
  %s1301 = scalar_lea.vmem %s11, 128
  %v1302 = vld [vmem:[%s1301] sm:$0xff]
  %v1303 = vld [vmem:[%s1301 + $0x8] sm:$0xff]
  %v1304 = vld [vmem:[%s1301 + $0x10] sm:$0xff]
  %v1305 = vld [vmem:[%s1301 + $0x18] sm:$0xff]
  %v1306 = vld [vmem:[%s1301 + $0x20] sm:$0xff]
  %v1307 = vld [vmem:[%s1301 + $0x28] sm:$0xff]
  %v1308 = vld [vmem:[%s1301 + $0x30] sm:$0xff]
  %v1309 = vld [vmem:[%s1301 + $0x38] sm:$0xff]
  %s1310 = scalar_lea.vmem %s12, 2
  %v1311 = vld [vmem:[%s1310] sm:$0x1]
  %v1313 = vlaneseq
  %v1314 = vshrl.u32 %v1313, 7
  %v1315 = vsub.s32 0, %v1314
  %v1316 = vrot.slane %v1311, %v1315
  %1318 = vmatprep.subr.mxu0 0.0
  %1319 = vmatpush1.msra.mxu0 0.0
  %1320 = vmatprep.subr.mxu0 0.0
  %1321 = vmatpush1.msra.mxu0 0.0
  %1322 = vmatprep.subr.mxu0 0.0
  %1323 = vmatpush1.msra.mxu0 0.0
  %1324 = vmatprep.subr.mxu0 0.0
  %1325 = vmatpush1.msra.mxu0 0.0
  %1326 = vmatprep.subr.mxu0 0.0
  %1327 = vmatpush1.msra.mxu0 0.0
  %1328 = vmatprep.subr.mxu0 0.0
  %1329 = vmatpush1.msra.mxu0 0.0
  %1330 = vmatprep.subr.mxu0 0.0
  %1331 = vmatpush1.msra.mxu0 0.0
  %1332 = vmatprep.subr.mxu0 0.0
  %1333 = vmatpush1.msra.mxu0 0.0
  %1334 = vmatprep.subr.mxu0 0.0
  %1335 = vmatpush1.msra.mxu0 %v1309
  %1336 = vmatprep.subr.mxu0 0.0
  %1337 = vmatpush1.msra.mxu0 %v1308
  %1338 = vmatprep.subr.mxu0 0.0
  %1339 = vmatpush1.msra.mxu0 %v1307
  %1340 = vmatprep.subr.mxu0 0.0
  %1341 = vmatpush1.msra.mxu0 %v1306
  %1342 = vmatprep.subr.mxu0 0.0
  %1343 = vmatpush1.msra.mxu0 %v1305
  %1344 = vmatprep.subr.mxu0 0.0
  %1345 = vmatpush1.msra.mxu0 %v1304
  %1346 = vmatprep.subr.mxu0 0.0
  %1347 = vmatpush1.msra.mxu0 %v1303
  %1348 = vmatprep.subr.mxu0 0.0
  %1349 = vmatpush1.msra.mxu0 %v1302
  %1350 = vmatprep.subr.mxu0 0.0
  %1351 = vmatpush2.msra.mxu0 0.0
  %1352 = vmatprep.subr.mxu0 0.0
  %1353 = vmatpush2.msra.mxu0 0.0
  %1354 = vmatprep.subr.mxu0 0.0
  %1355 = vmatpush2.msra.mxu0 0.0
  %1356 = vmatprep.subr.mxu0 0.0
  %1357 = vmatpush2.msra.mxu0 0.0
  %1358 = vmatprep.subr.mxu0 0.0
  %1359 = vmatpush2.msra.mxu0 0.0
  %1360 = vmatprep.subr.mxu0 0.0
  %1361 = vmatpush2.msra.mxu0 0.0
  %1362 = vmatprep.subr.mxu0 0.0
  %1363 = vmatpush2.msra.mxu0 0.0
  %1364 = vmatprep.subr.mxu0 0.0
  %1365 = vmatpush2.msra.mxu0 0.0
  %1366 = vmatprep.subr.mxu0 0.0
  %1367 = vmatpush2.msra.mxu0 0.0
  %1368 = vmatprep.subr.mxu0 0.0
  %1369 = vmatpush2.msra.mxu0 0.0
  %1370 = vmatprep.subr.mxu0 0.0
  %1371 = vmatpush2.msra.mxu0 0.0
  %1372 = vmatprep.subr.mxu0 0.0
  %1373 = vmatpush2.msra.mxu0 0.0
  %1374 = vmatprep.subr.mxu0 0.0
  %1375 = vmatpush2.msra.mxu0 0.0
  %1376 = vmatprep.subr.mxu0 0.0
  %1377 = vmatpush2.msra.mxu0 0.0
  %1378 = vmatprep.subr.mxu0 0.0
  %1379 = vmatpush2.msra.mxu0 0.0
  %1380 = vmatprep.subr.mxu0 0.0
  %1381 = vmatpush2.msra.mxu0 0.0
  %1382 = vmatprep.mubr.f32.mxu0 0.0
  %1383 = vmatmul.mubr.f32.gmra.mxu0 %v1138
  %v1384 = vpop.f32.mrf.mxu0
  %v1385 = vadd.f32 %v1316, %v1384
  %v1386 = vpop.f32.mrf.mxu0
  %1387 = vdwg.mxu0
  %v1388 = vmax.f32 %v1385, 0.0
  %1389 = vst.msk [vmem:[#allocation2 + $0x10] sm:$0xff] %vm75, %v1388
  %s1390 = scalar_lea.vmem %s11, 192
  %v1391 = vld [vmem:[%s1390] sm:$0xff]
  %v1392 = vld [vmem:[%s1390 + $0x8] sm:$0xff]
  %v1393 = vld [vmem:[%s1390 + $0x10] sm:$0xff]
  %v1394 = vld [vmem:[%s1390 + $0x18] sm:$0xff]
  %v1395 = vld [vmem:[%s1390 + $0x20] sm:$0xff]
  %v1396 = vld [vmem:[%s1390 + $0x28] sm:$0xff]
  %v1397 = vld [vmem:[%s1390 + $0x30] sm:$0xff]
  %v1398 = vld [vmem:[%s1390 + $0x38] sm:$0xff]
  %s1399 = scalar_lea.vmem %s12, 3
  %v1400 = vld [vmem:[%s1399] sm:$0x1]
  %v1402 = vlaneseq
  %v1403 = vshrl.u32 %v1402, 7
  %v1404 = vsub.s32 0, %v1403
  %v1405 = vrot.slane %v1400, %v1404
  %1407 = vmatprep.subr.mxu0 0.0
  %1408 = vmatpush1.msra.mxu0 0.0
  %1409 = vmatprep.subr.mxu0 0.0
  %1410 = vmatpush1.msra.mxu0 0.0
  %1411 = vmatprep.subr.mxu0 0.0
  %1412 = vmatpush1.msra.mxu0 0.0
  %1413 = vmatprep.subr.mxu0 0.0
  %1414 = vmatpush1.msra.mxu0 0.0
  %1415 = vmatprep.subr.mxu0 0.0
  %1416 = vmatpush1.msra.mxu0 0.0
  %1417 = vmatprep.subr.mxu0 0.0
  %1418 = vmatpush1.msra.mxu0 0.0
  %1419 = vmatprep.subr.mxu0 0.0
  %1420 = vmatpush1.msra.mxu0 0.0
  %1421 = vmatprep.subr.mxu0 0.0
  %1422 = vmatpush1.msra.mxu0 0.0
  %1423 = vmatprep.subr.mxu0 0.0
  %1424 = vmatpush1.msra.mxu0 %v1398
  %1425 = vmatprep.subr.mxu0 0.0
  %1426 = vmatpush1.msra.mxu0 %v1397
  %1427 = vmatprep.subr.mxu0 0.0
  %1428 = vmatpush1.msra.mxu0 %v1396
  %1429 = vmatprep.subr.mxu0 0.0
  %1430 = vmatpush1.msra.mxu0 %v1395
  %1431 = vmatprep.subr.mxu0 0.0
  %1432 = vmatpush1.msra.mxu0 %v1394
  %1433 = vmatprep.subr.mxu0 0.0
  %1434 = vmatpush1.msra.mxu0 %v1393
  %1435 = vmatprep.subr.mxu0 0.0
  %1436 = vmatpush1.msra.mxu0 %v1392
  %1437 = vmatprep.subr.mxu0 0.0
  %1438 = vmatpush1.msra.mxu0 %v1391
  %1439 = vmatprep.subr.mxu0 0.0
  %1440 = vmatpush2.msra.mxu0 0.0
  %1441 = vmatprep.subr.mxu0 0.0
  %1442 = vmatpush2.msra.mxu0 0.0
  %1443 = vmatprep.subr.mxu0 0.0
  %1444 = vmatpush2.msra.mxu0 0.0
  %1445 = vmatprep.subr.mxu0 0.0
  %1446 = vmatpush2.msra.mxu0 0.0
  %1447 = vmatprep.subr.mxu0 0.0
  %1448 = vmatpush2.msra.mxu0 0.0
  %1449 = vmatprep.subr.mxu0 0.0
  %1450 = vmatpush2.msra.mxu0 0.0
  %1451 = vmatprep.subr.mxu0 0.0
  %1452 = vmatpush2.msra.mxu0 0.0
  %1453 = vmatprep.subr.mxu0 0.0
  %1454 = vmatpush2.msra.mxu0 0.0
  %1455 = vmatprep.subr.mxu0 0.0
  %1456 = vmatpush2.msra.mxu0 0.0
  %1457 = vmatprep.subr.mxu0 0.0
  %1458 = vmatpush2.msra.mxu0 0.0
  %1459 = vmatprep.subr.mxu0 0.0
  %1460 = vmatpush2.msra.mxu0 0.0
  %1461 = vmatprep.subr.mxu0 0.0
  %1462 = vmatpush2.msra.mxu0 0.0
  %1463 = vmatprep.subr.mxu0 0.0
  %1464 = vmatpush2.msra.mxu0 0.0
  %1465 = vmatprep.subr.mxu0 0.0
  %1466 = vmatpush2.msra.mxu0 0.0
  %1467 = vmatprep.subr.mxu0 0.0
  %1468 = vmatpush2.msra.mxu0 0.0
  %1469 = vmatprep.subr.mxu0 0.0
  %1470 = vmatpush2.msra.mxu0 0.0
  %1471 = vmatprep.mubr.f32.mxu0 0.0
  %1472 = vmatmul.mubr.f32.gmra.mxu0 %v1138
  %v1473 = vpop.f32.mrf.mxu0
  %v1474 = vadd.f32 %v1405, %v1473
  %v1475 = vpop.f32.mrf.mxu0
  %1476 = vdwg.mxu0
  %v1477 = vmax.f32 %v1474, 0.0
  %1478 = vst.msk [vmem:[#allocation2 + $0x18] sm:$0xff] %vm75, %v1477
  %s1479 = scalar_lea.vmem %s11, 256
  %v1480 = vld [vmem:[%s1479] sm:$0xff]
  %v1481 = vld [vmem:[%s1479 + $0x8] sm:$0xff]
  %v1482 = vld [vmem:[%s1479 + $0x10] sm:$0xff]
  %v1483 = vld [vmem:[%s1479 + $0x18] sm:$0xff]
  %v1484 = vld [vmem:[%s1479 + $0x20] sm:$0xff]
  %v1485 = vld [vmem:[%s1479 + $0x28] sm:$0xff]
  %v1486 = vld [vmem:[%s1479 + $0x30] sm:$0xff]
  %v1487 = vld [vmem:[%s1479 + $0x38] sm:$0xff]
  %s1488 = scalar_lea.vmem %s12, 4
  %v1489 = vld [vmem:[%s1488] sm:$0x1]
  %v1491 = vlaneseq
  %v1492 = vshrl.u32 %v1491, 7
  %v1493 = vsub.s32 0, %v1492
  %v1494 = vrot.slane %v1489, %v1493
  %1496 = vmatprep.subr.mxu0 0.0
  %1497 = vmatpush1.msra.mxu0 0.0
  %1498 = vmatprep.subr.mxu0 0.0
  %1499 = vmatpush1.msra.mxu0 0.0
  %1500 = vmatprep.subr.mxu0 0.0
  %1501 = vmatpush1.msra.mxu0 0.0
  %1502 = vmatprep.subr.mxu0 0.0
  %1503 = vmatpush1.msra.mxu0 0.0
  %1504 = vmatprep.subr.mxu0 0.0
  %1505 = vmatpush1.msra.mxu0 0.0
  %1506 = vmatprep.subr.mxu0 0.0
  %1507 = vmatpush1.msra.mxu0 0.0
  %1508 = vmatprep.subr.mxu0 0.0
  %1509 = vmatpush1.msra.mxu0 0.0
  %1510 = vmatprep.subr.mxu0 0.0
  %1511 = vmatpush1.msra.mxu0 0.0
  %1512 = vmatprep.subr.mxu0 0.0
  %1513 = vmatpush1.msra.mxu0 %v1487
  %1514 = vmatprep.subr.mxu0 0.0
  %1515 = vmatpush1.msra.mxu0 %v1486
  %1516 = vmatprep.subr.mxu0 0.0
  %1517 = vmatpush1.msra.mxu0 %v1485
  %1518 = vmatprep.subr.mxu0 0.0
  %1519 = vmatpush1.msra.mxu0 %v1484
  %1520 = vmatprep.subr.mxu0 0.0
  %1521 = vmatpush1.msra.mxu0 %v1483
  %1522 = vmatprep.subr.mxu0 0.0
  %1523 = vmatpush1.msra.mxu0 %v1482
  %1524 = vmatprep.subr.mxu0 0.0
  %1525 = vmatpush1.msra.mxu0 %v1481
  %1526 = vmatprep.subr.mxu0 0.0
  %1527 = vmatpush1.msra.mxu0 %v1480
  %1528 = vmatprep.subr.mxu0 0.0
  %1529 = vmatpush2.msra.mxu0 0.0
  %1530 = vmatprep.subr.mxu0 0.0
  %1531 = vmatpush2.msra.mxu0 0.0
  %1532 = vmatprep.subr.mxu0 0.0
  %1533 = vmatpush2.msra.mxu0 0.0
  %1534 = vmatprep.subr.mxu0 0.0
  %1535 = vmatpush2.msra.mxu0 0.0
  %1536 = vmatprep.subr.mxu0 0.0
  %1537 = vmatpush2.msra.mxu0 0.0
  %1538 = vmatprep.subr.mxu0 0.0
  %1539 = vmatpush2.msra.mxu0 0.0
  %1540 = vmatprep.subr.mxu0 0.0
  %1541 = vmatpush2.msra.mxu0 0.0
  %1542 = vmatprep.subr.mxu0 0.0
  %1543 = vmatpush2.msra.mxu0 0.0
  %1544 = vmatprep.subr.mxu0 0.0
  %1545 = vmatpush2.msra.mxu0 0.0
  %1546 = vmatprep.subr.mxu0 0.0
  %1547 = vmatpush2.msra.mxu0 0.0
  %1548 = vmatprep.subr.mxu0 0.0
  %1549 = vmatpush2.msra.mxu0 0.0
  %1550 = vmatprep.subr.mxu0 0.0
  %1551 = vmatpush2.msra.mxu0 0.0
  %1552 = vmatprep.subr.mxu0 0.0
  %1553 = vmatpush2.msra.mxu0 0.0
  %1554 = vmatprep.subr.mxu0 0.0
  %1555 = vmatpush2.msra.mxu0 0.0
  %1556 = vmatprep.subr.mxu0 0.0
  %1557 = vmatpush2.msra.mxu0 0.0
  %1558 = vmatprep.subr.mxu0 0.0
  %1559 = vmatpush2.msra.mxu0 0.0
  %1560 = vmatprep.mubr.f32.mxu0 0.0
  %1561 = vmatmul.mubr.f32.gmra.mxu0 %v1138
  %v1562 = vpop.f32.mrf.mxu0
  %v1563 = vadd.f32 %v1494, %v1562
  %v1564 = vpop.f32.mrf.mxu0
  %1565 = vdwg.mxu0
  %v1566 = vmax.f32 %v1563, 0.0
  %1567 = vst.msk [vmem:[#allocation2 + $0x20] sm:$0xff] %vm75, %v1566
  %s1568 = scalar_lea.vmem %s11, 320
  %v1569 = vld [vmem:[%s1568] sm:$0xff]
  %v1570 = vld [vmem:[%s1568 + $0x8] sm:$0xff]
  %v1571 = vld [vmem:[%s1568 + $0x10] sm:$0xff]
  %v1572 = vld [vmem:[%s1568 + $0x18] sm:$0xff]
  %v1573 = vld [vmem:[%s1568 + $0x20] sm:$0xff]
  %v1574 = vld [vmem:[%s1568 + $0x28] sm:$0xff]
  %v1575 = vld [vmem:[%s1568 + $0x30] sm:$0xff]
  %v1576 = vld [vmem:[%s1568 + $0x38] sm:$0xff]
  %s1577 = scalar_lea.vmem %s12, 5
  %v1578 = vld [vmem:[%s1577] sm:$0x1]
  %v1580 = vlaneseq
  %v1581 = vshrl.u32 %v1580, 7
  %v1582 = vsub.s32 0, %v1581
  %v1583 = vrot.slane %v1578, %v1582
  %1585 = vmatprep.subr.mxu0 0.0
  %1586 = vmatpush1.msra.mxu0 0.0
  %1587 = vmatprep.subr.mxu0 0.0
  %1588 = vmatpush1.msra.mxu0 0.0
  %1589 = vmatprep.subr.mxu0 0.0
  %1590 = vmatpush1.msra.mxu0 0.0
  %1591 = vmatprep.subr.mxu0 0.0
  %1592 = vmatpush1.msra.mxu0 0.0
  %1593 = vmatprep.subr.mxu0 0.0
  %1594 = vmatpush1.msra.mxu0 0.0
  %1595 = vmatprep.subr.mxu0 0.0
  %1596 = vmatpush1.msra.mxu0 0.0
  %1597 = vmatprep.subr.mxu0 0.0
  %1598 = vmatpush1.msra.mxu0 0.0
  %1599 = vmatprep.subr.mxu0 0.0
  %1600 = vmatpush1.msra.mxu0 0.0
  %1601 = vmatprep.subr.mxu0 0.0
  %1602 = vmatpush1.msra.mxu0 %v1576
  %1603 = vmatprep.subr.mxu0 0.0
  %1604 = vmatpush1.msra.mxu0 %v1575
  %1605 = vmatprep.subr.mxu0 0.0
  %1606 = vmatpush1.msra.mxu0 %v1574
  %1607 = vmatprep.subr.mxu0 0.0
  %1608 = vmatpush1.msra.mxu0 %v1573
  %1609 = vmatprep.subr.mxu0 0.0
  %1610 = vmatpush1.msra.mxu0 %v1572
  %1611 = vmatprep.subr.mxu0 0.0
  %1612 = vmatpush1.msra.mxu0 %v1571
  %1613 = vmatprep.subr.mxu0 0.0
  %1614 = vmatpush1.msra.mxu0 %v1570
  %1615 = vmatprep.subr.mxu0 0.0
  %1616 = vmatpush1.msra.mxu0 %v1569
  %1617 = vmatprep.subr.mxu0 0.0
  %1618 = vmatpush2.msra.mxu0 0.0
  %1619 = vmatprep.subr.mxu0 0.0
  %1620 = vmatpush2.msra.mxu0 0.0
  %1621 = vmatprep.subr.mxu0 0.0
  %1622 = vmatpush2.msra.mxu0 0.0
  %1623 = vmatprep.subr.mxu0 0.0
  %1624 = vmatpush2.msra.mxu0 0.0
  %1625 = vmatprep.subr.mxu0 0.0
  %1626 = vmatpush2.msra.mxu0 0.0
  %1627 = vmatprep.subr.mxu0 0.0
  %1628 = vmatpush2.msra.mxu0 0.0
  %1629 = vmatprep.subr.mxu0 0.0
  %1630 = vmatpush2.msra.mxu0 0.0
  %1631 = vmatprep.subr.mxu0 0.0
  %1632 = vmatpush2.msra.mxu0 0.0
  %1633 = vmatprep.subr.mxu0 0.0
  %1634 = vmatpush2.msra.mxu0 0.0
  %1635 = vmatprep.subr.mxu0 0.0
  %1636 = vmatpush2.msra.mxu0 0.0
  %1637 = vmatprep.subr.mxu0 0.0
  %1638 = vmatpush2.msra.mxu0 0.0
  %1639 = vmatprep.subr.mxu0 0.0
  %1640 = vmatpush2.msra.mxu0 0.0
  %1641 = vmatprep.subr.mxu0 0.0
  %1642 = vmatpush2.msra.mxu0 0.0
  %1643 = vmatprep.subr.mxu0 0.0
  %1644 = vmatpush2.msra.mxu0 0.0
  %1645 = vmatprep.subr.mxu0 0.0
  %1646 = vmatpush2.msra.mxu0 0.0
  %1647 = vmatprep.subr.mxu0 0.0
  %1648 = vmatpush2.msra.mxu0 0.0
  %1649 = vmatprep.mubr.f32.mxu0 0.0
  %1650 = vmatmul.mubr.f32.gmra.mxu0 %v1138
  %v1651 = vpop.f32.mrf.mxu0
  %v1652 = vadd.f32 %v1583, %v1651
  %v1653 = vpop.f32.mrf.mxu0
  %1654 = vdwg.mxu0
  %v1655 = vmax.f32 %v1652, 0.0
  %1656 = vst.msk [vmem:[#allocation2 + $0x28] sm:$0xff] %vm75, %v1655
  %s1657 = scalar_lea.vmem %s11, 384
  %v1658 = vld [vmem:[%s1657] sm:$0xff]
  %v1659 = vld [vmem:[%s1657 + $0x8] sm:$0xff]
  %v1660 = vld [vmem:[%s1657 + $0x10] sm:$0xff]
  %v1661 = vld [vmem:[%s1657 + $0x18] sm:$0xff]
  %v1662 = vld [vmem:[%s1657 + $0x20] sm:$0xff]
  %v1663 = vld [vmem:[%s1657 + $0x28] sm:$0xff]
  %v1664 = vld [vmem:[%s1657 + $0x30] sm:$0xff]
  %v1665 = vld [vmem:[%s1657 + $0x38] sm:$0xff]
  %s1666 = scalar_lea.vmem %s12, 6
  %v1667 = vld [vmem:[%s1666] sm:$0x1]
  %v1669 = vlaneseq
  %v1670 = vshrl.u32 %v1669, 7
  %v1671 = vsub.s32 0, %v1670
  %v1672 = vrot.slane %v1667, %v1671
  %1674 = vmatprep.subr.mxu0 0.0
  %1675 = vmatpush1.msra.mxu0 0.0
  %1676 = vmatprep.subr.mxu0 0.0
  %1677 = vmatpush1.msra.mxu0 0.0
  %1678 = vmatprep.subr.mxu0 0.0
  %1679 = vmatpush1.msra.mxu0 0.0
  %1680 = vmatprep.subr.mxu0 0.0
  %1681 = vmatpush1.msra.mxu0 0.0
  %1682 = vmatprep.subr.mxu0 0.0
  %1683 = vmatpush1.msra.mxu0 0.0
  %1684 = vmatprep.subr.mxu0 0.0
  %1685 = vmatpush1.msra.mxu0 0.0
  %1686 = vmatprep.subr.mxu0 0.0
  %1687 = vmatpush1.msra.mxu0 0.0
  %1688 = vmatprep.subr.mxu0 0.0
  %1689 = vmatpush1.msra.mxu0 0.0
  %1690 = vmatprep.subr.mxu0 0.0
  %1691 = vmatpush1.msra.mxu0 %v1665
  %1692 = vmatprep.subr.mxu0 0.0
  %1693 = vmatpush1.msra.mxu0 %v1664
  %1694 = vmatprep.subr.mxu0 0.0
  %1695 = vmatpush1.msra.mxu0 %v1663
  %1696 = vmatprep.subr.mxu0 0.0
  %1697 = vmatpush1.msra.mxu0 %v1662
  %1698 = vmatprep.subr.mxu0 0.0
  %1699 = vmatpush1.msra.mxu0 %v1661
  %1700 = vmatprep.subr.mxu0 0.0
  %1701 = vmatpush1.msra.mxu0 %v1660
  %1702 = vmatprep.subr.mxu0 0.0
  %1703 = vmatpush1.msra.mxu0 %v1659
  %1704 = vmatprep.subr.mxu0 0.0
  %1705 = vmatpush1.msra.mxu0 %v1658
  %1706 = vmatprep.subr.mxu0 0.0
  %1707 = vmatpush2.msra.mxu0 0.0
  %1708 = vmatprep.subr.mxu0 0.0
  %1709 = vmatpush2.msra.mxu0 0.0
  %1710 = vmatprep.subr.mxu0 0.0
  %1711 = vmatpush2.msra.mxu0 0.0
  %1712 = vmatprep.subr.mxu0 0.0
  %1713 = vmatpush2.msra.mxu0 0.0
  %1714 = vmatprep.subr.mxu0 0.0
  %1715 = vmatpush2.msra.mxu0 0.0
  %1716 = vmatprep.subr.mxu0 0.0
  %1717 = vmatpush2.msra.mxu0 0.0
  %1718 = vmatprep.subr.mxu0 0.0
  %1719 = vmatpush2.msra.mxu0 0.0
  %1720 = vmatprep.subr.mxu0 0.0
  %1721 = vmatpush2.msra.mxu0 0.0
  %1722 = vmatprep.subr.mxu0 0.0
  %1723 = vmatpush2.msra.mxu0 0.0
  %1724 = vmatprep.subr.mxu0 0.0
  %1725 = vmatpush2.msra.mxu0 0.0
  %1726 = vmatprep.subr.mxu0 0.0
  %1727 = vmatpush2.msra.mxu0 0.0
  %1728 = vmatprep.subr.mxu0 0.0
  %1729 = vmatpush2.msra.mxu0 0.0
  %1730 = vmatprep.subr.mxu0 0.0
  %1731 = vmatpush2.msra.mxu0 0.0
  %1732 = vmatprep.subr.mxu0 0.0
  %1733 = vmatpush2.msra.mxu0 0.0
  %1734 = vmatprep.subr.mxu0 0.0
  %1735 = vmatpush2.msra.mxu0 0.0
  %1736 = vmatprep.subr.mxu0 0.0
  %1737 = vmatpush2.msra.mxu0 0.0
  %1738 = vmatprep.mubr.f32.mxu0 0.0
  %1739 = vmatmul.mubr.f32.gmra.mxu0 %v1138
  %v1740 = vpop.f32.mrf.mxu0
  %v1741 = vadd.f32 %v1672, %v1740
  %v1742 = vpop.f32.mrf.mxu0
  %1743 = vdwg.mxu0
  %v1744 = vmax.f32 %v1741, 0.0
  %1745 = vst.msk [vmem:[#allocation2 + $0x30] sm:$0xff] %vm75, %v1744
  %s1746 = scalar_lea.vmem %s11, 448
  %v1747 = vld [vmem:[%s1746] sm:$0xff]
  %v1748 = vld [vmem:[%s1746 + $0x8] sm:$0xff]
  %v1749 = vld [vmem:[%s1746 + $0x10] sm:$0xff]
  %v1750 = vld [vmem:[%s1746 + $0x18] sm:$0xff]
  %v1751 = vld [vmem:[%s1746 + $0x20] sm:$0xff]
  %v1752 = vld [vmem:[%s1746 + $0x28] sm:$0xff]
  %v1753 = vld [vmem:[%s1746 + $0x30] sm:$0xff]
  %v1754 = vld [vmem:[%s1746 + $0x38] sm:$0xff]
  %s1755 = scalar_lea.vmem %s12, 7
  %v1756 = vld [vmem:[%s1755] sm:$0x1]
  %v1758 = vlaneseq
  %v1759 = vshrl.u32 %v1758, 7
  %v1760 = vsub.s32 0, %v1759
  %v1761 = vrot.slane %v1756, %v1760
  %1763 = vmatprep.subr.mxu0 0.0
  %1764 = vmatpush1.msra.mxu0 0.0
  %1765 = vmatprep.subr.mxu0 0.0
  %1766 = vmatpush1.msra.mxu0 0.0
  %1767 = vmatprep.subr.mxu0 0.0
  %1768 = vmatpush1.msra.mxu0 0.0
  %1769 = vmatprep.subr.mxu0 0.0
  %1770 = vmatpush1.msra.mxu0 0.0
  %1771 = vmatprep.subr.mxu0 0.0
  %1772 = vmatpush1.msra.mxu0 0.0
  %1773 = vmatprep.subr.mxu0 0.0
  %1774 = vmatpush1.msra.mxu0 0.0
  %1775 = vmatprep.subr.mxu0 0.0
  %1776 = vmatpush1.msra.mxu0 0.0
  %1777 = vmatprep.subr.mxu0 0.0
  %1778 = vmatpush1.msra.mxu0 0.0
  %1779 = vmatprep.subr.mxu0 0.0
  %1780 = vmatpush1.msra.mxu0 %v1754
  %1781 = vmatprep.subr.mxu0 0.0
  %1782 = vmatpush1.msra.mxu0 %v1753
  %1783 = vmatprep.subr.mxu0 0.0
  %1784 = vmatpush1.msra.mxu0 %v1752
  %1785 = vmatprep.subr.mxu0 0.0
  %1786 = vmatpush1.msra.mxu0 %v1751
  %1787 = vmatprep.subr.mxu0 0.0
  %1788 = vmatpush1.msra.mxu0 %v1750
  %1789 = vmatprep.subr.mxu0 0.0
  %1790 = vmatpush1.msra.mxu0 %v1749
  %1791 = vmatprep.subr.mxu0 0.0
  %1792 = vmatpush1.msra.mxu0 %v1748
  %1793 = vmatprep.subr.mxu0 0.0
  %1794 = vmatpush1.msra.mxu0 %v1747
  %1795 = vmatprep.subr.mxu0 0.0
  %1796 = vmatpush2.msra.mxu0 0.0
  %1797 = vmatprep.subr.mxu0 0.0
  %1798 = vmatpush2.msra.mxu0 0.0
  %1799 = vmatprep.subr.mxu0 0.0
  %1800 = vmatpush2.msra.mxu0 0.0
  %1801 = vmatprep.subr.mxu0 0.0
  %1802 = vmatpush2.msra.mxu0 0.0
  %1803 = vmatprep.subr.mxu0 0.0
  %1804 = vmatpush2.msra.mxu0 0.0
  %1805 = vmatprep.subr.mxu0 0.0
  %1806 = vmatpush2.msra.mxu0 0.0
  %1807 = vmatprep.subr.mxu0 0.0
  %1808 = vmatpush2.msra.mxu0 0.0
  %1809 = vmatprep.subr.mxu0 0.0
  %1810 = vmatpush2.msra.mxu0 0.0
  %1811 = vmatprep.subr.mxu0 0.0
  %1812 = vmatpush2.msra.mxu0 0.0
  %1813 = vmatprep.subr.mxu0 0.0
  %1814 = vmatpush2.msra.mxu0 0.0
  %1815 = vmatprep.subr.mxu0 0.0
  %1816 = vmatpush2.msra.mxu0 0.0
  %1817 = vmatprep.subr.mxu0 0.0
  %1818 = vmatpush2.msra.mxu0 0.0
  %1819 = vmatprep.subr.mxu0 0.0
  %1820 = vmatpush2.msra.mxu0 0.0
  %1821 = vmatprep.subr.mxu0 0.0
  %1822 = vmatpush2.msra.mxu0 0.0
  %1823 = vmatprep.subr.mxu0 0.0
  %1824 = vmatpush2.msra.mxu0 0.0
  %1825 = vmatprep.subr.mxu0 0.0
  %1826 = vmatpush2.msra.mxu0 0.0
  %1827 = vmatprep.mubr.f32.mxu0 0.0
  %1828 = vmatmul.mubr.f32.gmra.mxu0 %v1138
  %v1829 = vpop.f32.mrf.mxu0
  %v1830 = vadd.f32 %v1761, %v1829
  %v1831 = vpop.f32.mrf.mxu0
  %1832 = vdwg.mxu0
  %v1833 = vmax.f32 %v1830, 0.0
  %1834 = vst.msk [vmem:[#allocation2 + $0x38] sm:$0xff] %vm75, %v1833
  %v1835 = vld [vmem:[#allocation2] sm:$0xff]
  %v1836 = vld [vmem:[#allocation2 + $0x8] sm:$0xff]
  %v1837 = vld [vmem:[#allocation2 + $0x10] sm:$0xff]
  %v1838 = vld [vmem:[#allocation2 + $0x18] sm:$0xff]
  %v1839 = vld [vmem:[#allocation2 + $0x20] sm:$0xff]
  %v1840 = vld [vmem:[#allocation2 + $0x28] sm:$0xff]
  %v1841 = vld [vmem:[#allocation2 + $0x30] sm:$0xff]
  %v1842 = vld [vmem:[#allocation2 + $0x38] sm:$0xff]
  %v1843 = vld [vmem:[%s13] sm:$0xff]
  %v1844 = vld [vmem:[%s13 + $0x8] sm:$0xff]
  %v1845 = vld [vmem:[%s13 + $0x10] sm:$0xff]
  %v1846 = vld [vmem:[%s13 + $0x18] sm:$0xff]
  %v1847 = vld [vmem:[%s14] sm:$0x1]
  %v1849 = vlaneseq
  %v1850 = vshrl.u32 %v1849, 7
  %v1851 = vsub.s32 0, %v1850
  %v1852 = vrot.slane %v1847, %v1851
  %v1855 = vsel %vm75, %v1835, 0
  %v1858 = vsel %vm75, %v1836, 0
  %v1861 = vsel %vm75, %v1837, 0
  %v1864 = vsel %vm75, %v1838, 0
  %v1867 = vsel %vm75, %v1839, 0
  %v1870 = vsel %vm75, %v1840, 0
  %v1873 = vsel %vm75, %v1841, 0
  %v1876 = vsel %vm75, %v1842, 0
  %1878 = vmatprep.subr.mxu0 0.0
  %1879 = vmatpush1.msra.mxu0 0.0
  %1880 = vmatprep.subr.mxu0 0.0
  %1881 = vmatpush1.msra.mxu0 0.0
  %1882 = vmatprep.subr.mxu0 0.0
  %1883 = vmatpush1.msra.mxu0 0.0
  %1884 = vmatprep.subr.mxu0 0.0
  %1885 = vmatpush1.msra.mxu0 0.0
  %1886 = vmatprep.subr.mxu0 0.0
  %1887 = vmatpush1.msra.mxu0 0.0
  %1888 = vmatprep.subr.mxu0 0.0
  %1889 = vmatpush1.msra.mxu0 0.0
  %1890 = vmatprep.subr.mxu0 0.0
  %1891 = vmatpush1.msra.mxu0 0.0
  %1892 = vmatprep.subr.mxu0 0.0
  %1893 = vmatpush1.msra.mxu0 0.0
  %1894 = vmatprep.subr.mxu0 0.0
  %1895 = vmatpush1.msra.mxu0 0.0
  %1896 = vmatprep.subr.mxu0 0.0
  %1897 = vmatpush1.msra.mxu0 0.0
  %1898 = vmatprep.subr.mxu0 0.0
  %1899 = vmatpush1.msra.mxu0 0.0
  %1900 = vmatprep.subr.mxu0 0.0
  %1901 = vmatpush1.msra.mxu0 0.0
  %1902 = vmatprep.subr.mxu0 0.0
  %1903 = vmatpush1.msra.mxu0 %v1846
  %1904 = vmatprep.subr.mxu0 0.0
  %1905 = vmatpush1.msra.mxu0 %v1845
  %1906 = vmatprep.subr.mxu0 0.0
  %1907 = vmatpush1.msra.mxu0 %v1844
  %1908 = vmatprep.subr.mxu0 0.0
  %1909 = vmatpush1.msra.mxu0 %v1843
  %1910 = vmatprep.subr.mxu0 0.0
  %1911 = vmatpush2.msra.mxu0 0.0
  %1912 = vmatprep.subr.mxu0 0.0
  %1913 = vmatpush2.msra.mxu0 0.0
  %1914 = vmatprep.subr.mxu0 0.0
  %1915 = vmatpush2.msra.mxu0 0.0
  %1916 = vmatprep.subr.mxu0 0.0
  %1917 = vmatpush2.msra.mxu0 0.0
  %1918 = vmatprep.subr.mxu0 0.0
  %1919 = vmatpush2.msra.mxu0 0.0
  %1920 = vmatprep.subr.mxu0 0.0
  %1921 = vmatpush2.msra.mxu0 0.0
  %1922 = vmatprep.subr.mxu0 0.0
  %1923 = vmatpush2.msra.mxu0 0.0
  %1924 = vmatprep.subr.mxu0 0.0
  %1925 = vmatpush2.msra.mxu0 0.0
  %1926 = vmatprep.subr.mxu0 0.0
  %1927 = vmatpush2.msra.mxu0 0.0
  %1928 = vmatprep.subr.mxu0 0.0
  %1929 = vmatpush2.msra.mxu0 0.0
  %1930 = vmatprep.subr.mxu0 0.0
  %1931 = vmatpush2.msra.mxu0 0.0
  %1932 = vmatprep.subr.mxu0 0.0
  %1933 = vmatpush2.msra.mxu0 0.0
  %1934 = vmatprep.subr.mxu0 0.0
  %1935 = vmatpush2.msra.mxu0 0.0
  %1936 = vmatprep.subr.mxu0 0.0
  %1937 = vmatpush2.msra.mxu0 0.0
  %1938 = vmatprep.subr.mxu0 0.0
  %1939 = vmatpush2.msra.mxu0 0.0
  %1940 = vmatprep.subr.mxu0 0.0
  %1941 = vmatpush2.msra.mxu0 0.0
  %1942 = vmatprep.mubr.f32.mxu0 0.0
  %1943 = vmatmul.mubr.f32.gmra.mxu0 %v1855
  %v1944 = vpop.f32.mrf.mxu0
  %v1945 = vadd.f32 %v1852, %v1944
  %v1946 = vpop.f32.mrf.mxu0
  %1947 = vmatprep.mubr.f32.mxu0 0.0
  %1948 = vmatmul.mubr.f32.gmra.mxu0 %v1858
  %v1949 = vpop.f32.mrf.mxu0
  %v1950 = vadd.f32 %v1852, %v1949
  %v1951 = vpop.f32.mrf.mxu0
  %1952 = vmatprep.mubr.f32.mxu0 0.0
  %1953 = vmatmul.mubr.f32.gmra.mxu0 %v1861
  %v1954 = vpop.f32.mrf.mxu0
  %v1955 = vadd.f32 %v1852, %v1954
  %v1956 = vpop.f32.mrf.mxu0
  %1957 = vmatprep.mubr.f32.mxu0 0.0
  %1958 = vmatmul.mubr.f32.gmra.mxu0 %v1864
  %v1959 = vpop.f32.mrf.mxu0
  %v1960 = vadd.f32 %v1852, %v1959
  %v1961 = vpop.f32.mrf.mxu0
  %1962 = vmatprep.mubr.f32.mxu0 0.0
  %1963 = vmatmul.mubr.f32.gmra.mxu0 %v1867
  %v1964 = vpop.f32.mrf.mxu0
  %v1965 = vadd.f32 %v1852, %v1964
  %v1966 = vpop.f32.mrf.mxu0
  %1967 = vmatprep.mubr.f32.mxu0 0.0
  %1968 = vmatmul.mubr.f32.gmra.mxu0 %v1870
  %v1969 = vpop.f32.mrf.mxu0
  %v1970 = vadd.f32 %v1852, %v1969
  %v1971 = vpop.f32.mrf.mxu0
  %1972 = vmatprep.mubr.f32.mxu0 0.0
  %1973 = vmatmul.mubr.f32.gmra.mxu0 %v1873
  %v1974 = vpop.f32.mrf.mxu0
  %v1975 = vadd.f32 %v1852, %v1974
  %v1976 = vpop.f32.mrf.mxu0
  %1977 = vmatprep.mubr.f32.mxu0 0.0
  %1978 = vmatmul.mubr.f32.gmra.mxu0 %v1876
  %v1979 = vpop.f32.mrf.mxu0
  %v1980 = vadd.f32 %v1852, %v1979
  %v1981 = vpop.f32.mrf.mxu0
  %1982 = vdwg.mxu0
  %1983 = vst.msk [vmem:[%s16] sm:$0xff] %vm75, %v1945
  %1984 = vst.msk [vmem:[%s16 + $0x8] sm:$0xff] %vm75, %v1950
  %1985 = vst.msk [vmem:[%s16 + $0x10] sm:$0xff] %vm75, %v1955
  %1986 = vst.msk [vmem:[%s16 + $0x18] sm:$0xff] %vm75, %v1960
  %1987 = vst.msk [vmem:[%s16 + $0x20] sm:$0xff] %vm75, %v1965
  %1988 = vst.msk [vmem:[%s16 + $0x28] sm:$0xff] %vm75, %v1970
  %1989 = vst.msk [vmem:[%s16 + $0x30] sm:$0xff] %vm75, %v1975
  %1990 = vst.msk [vmem:[%s16 + $0x38] sm:$0xff] %vm75, %v1980
  // Predicated region
  $region66: #{_lambda_.1} parent=0 // pred_check
    _
  $region67: #{_lambda_.1} parent=0 // pred_check_branch
    %1992 = sbr.rel (0) target = $region69
  $region68: #{_lambda_.1} parent=0 // pred_region
    _
  $region69: #{_lambda_.1} parent=0 // pred_fallthru
    _
  // Predicated region
  $region70: #{_lambda_.1} parent=0 // pred_check
    _
  $region71: #{_lambda_.1} parent=0 // pred_check_branch
    %1994 = sbr.rel (0) target = $region73
  $region72: #{_lambda_.1} parent=0 // pred_region
    _
  $region73: #{_lambda_.1} parent=0 // pred_fallthru
    _
  // Predicated region
  $region74: #{_lambda_.1} parent=0 // pred_check
    _
  $region75: #{_lambda_.1} parent=0 // pred_check_branch
    %1996 = sbr.rel (0) target = $region77
  $region76: #{_lambda_.1} parent=0 // pred_region
    _
  $region77: #{_lambda_.1} parent=0 // pred_fallthru
    _
  // Predicated region
  $region78: #{_lambda_.1} parent=0 // pred_check
    _
  $region79: #{_lambda_.1} parent=0 // pred_check_branch
    %1998 = sbr.rel (0) target = $region81
  $region80: #{_lambda_.1} parent=0 // pred_region
    _
  $region81: #{_lambda_.1} parent=0 // pred_fallthru
    _
  // Predicated region
  $region82: #{_lambda_.1} parent=0 // pred_check
    _
  $region83: #{_lambda_.1} parent=0 // pred_check_branch
    %2000 = sbr.rel (0) target = $region85
  $region84: #{_lambda_.1} parent=0 // pred_region
    _
  $region85: #{_lambda_.1} parent=0 // pred_fallthru
    _
  // Predicated region
  $region86: #{_lambda_.1} parent=0 // pred_check
    _
  $region87: #{_lambda_.1} parent=0 // pred_check_branch
    %2002 = sbr.rel (0) target = $region89
  $region88: #{_lambda_.1} parent=0 // pred_region
    _
  $region89: #{_lambda_.1} parent=0 // pred_fallthru
    _

</llo_original>
